<compile_context>
chip_gen: v6e
topology: v6e:2x2x1
jax: 0.10.0
libtpu: 0.0.40
codegen_flags: <defaults>
</compile_context>

<pallas_src>
import functools

import jax
import jax.numpy as jnp
from jax import lax
from jax.experimental import pallas as pl
from jax.experimental.pallas import tpu as pltpu


def _round_up(x, m):
    return ((x + m - 1) // m) * m


def block_kernel(x_ref, wqkv_ref, wp_ref, bp_ref, w1_ref, b1_ref, w2_ref,
                 b2_ref, out_ref, cat_ref, *, batch_per_block, seq_len,
                 num_heads, head_size):
    BB, T, H, hs = batch_per_block, seq_len, num_heads, head_size
    M = BB * T
    Hhs = H * hs

    x = x_ref[...]                                              # (M, E) bf16

    # Fused q|k|v projection: one wide MXU matmul, f32 accumulation.
    # Attention scale is already folded into the q columns (wrapper side).
    qkv = jnp.dot(x, wqkv_ref[...],
                  preferred_element_type=jnp.float32)           # (M, 3*Hhs)
    qkv = qkv.astype(jnp.bfloat16).reshape(BB, T, 3 * Hhs)      # single cast

    # Causal mask (kept: col <= row).  Large finite negative instead of -inf.
    row = lax.broadcasted_iota(jnp.int32, (T, T), 0)
    col = lax.broadcasted_iota(jnp.int32, (T, T), 1)
    causal = (col <= row)[None, :, :]                           # (1, T, T)

    # Per-head scores/softmax/PV (batched over the BB sequences in the block);
    # head outputs land at their lane offset in the VMEM scratch `cat_ref` so
    # the output projection below runs as ONE matmul with contraction depth
    # K = Hhs (identical math to concat(heads) @ Wp).
    for h in range(H):                                          # static loop
        sq = h * hs
        sk = Hhs + h * hs
        sv = 2 * Hhs + h * hs
        qh = qkv[:, :, sq:sq + hs]                              # (BB, T, hs)
        kh = qkv[:, :, sk:sk + hs]
        vh = qkv[:, :, sv:sv + hs]

        wei = jnp.einsum('btd,bsd->bts', qh, kh,
                         preferred_element_type=jnp.float32)    # (BB, T, T)
        wei = jnp.where(causal, wei, -1e30)
        wei = wei - jnp.max(wei, axis=-1, keepdims=True)        # stable
        p = jnp.exp(wei)
        p = p * pl.reciprocal(jnp.sum(p, axis=-1, keepdims=True), approx=True)

        ho = jnp.einsum('bts,bsd->btd', p.astype(jnp.bfloat16), vh,
                        preferred_element_type=jnp.float32)     # (BB, T, hs)
        cat_ref[:, sq:sq + hs] = ho.reshape(M, hs)              # f32 scratch

    cat = cat_ref[...].astype(jnp.bfloat16)                     # (M, Hhs)
    proj = jnp.dot(cat, wp_ref[...],
                   preferred_element_type=jnp.float32) + bp_ref[...]

    # FeedForward: Linear(E,4E) -> ReLU -> Linear(4E, E_pad) -> ReLU.
    # w2/b2 are zero-padded to a 128-lane-multiple output so the final store
    # is an unmasked, lane-dense vst (padded columns are exactly 0).
    h1 = jnp.dot(proj.astype(jnp.bfloat16), w1_ref[...],
                 preferred_element_type=jnp.float32) + b1_ref[...]
    h1 = jnp.maximum(h1, 0.0)
    h2 = jnp.dot(h1.astype(jnp.bfloat16), w2_ref[...],
                 preferred_element_type=jnp.float32) + b2_ref[...]
    h2 = jnp.maximum(h2, 0.0)

    out_ref[...] = h2.astype(out_ref.dtype)


def prepare_block_params(params, *, num_embds):
    """One-time weight preprocessing (call at init, NOT per forward):
    fold the attention scale into the q weight, pack W_qkv, cast matmul
    weights to bf16 (biases stay f32), zero-pad the final Linear to a
    128-lane-multiple output for lane-dense stores."""
    wq, wk, wv, wp, bp, w1, b1, w2, b2 = params
    scale = float(num_embds) ** -0.5
    bf16 = jnp.bfloat16
    e_out = w2.shape[1]
    e_pad = _round_up(e_out, 128)

    wqkv = jnp.concatenate([wq * scale, wk, wv], axis=1).astype(bf16)
    w2_pad = jnp.pad(w2, ((0, 0), (0, e_pad - e_out))).astype(bf16)
    b2_pad = jnp.pad(b2.astype(jnp.float32), ((0, 0), (0, e_pad - e_out)))

    return (wqkv, wp.astype(bf16), bp.astype(jnp.float32),
            w1.astype(bf16), b1.astype(jnp.float32),
            w2_pad, b2_pad)


@functools.partial(jax.jit, static_argnames=("num_heads", "head_size",
                                             "num_embds", "num_batch_blocks"))
def block_forward(x, prepped, *, num_heads, head_size, num_embds,
                  num_batch_blocks=1):
    """x: (B, T, E) f32.  prepped: output of prepare_block_params.
    num_batch_blocks: 1 at small shapes (single grid step); raise it (e.g. 2
    on v7x for megacore) only once each core gets >= ~256-512 rows, and keep
    the per-block live set under ~32 MiB on v7x."""
    wqkv, wp, bp, w1, b1, w2, b2 = prepped
    B, T, E = x.shape
    assert E == num_embds
    assert B % num_batch_blocks == 0
    BB = B // num_batch_blocks
    M = B * T
    rows_per_block = BB * T
    Hhs = num_heads * head_size
    HID = w1.shape[1]
    e_pad = w2.shape[1]

    x_flat = x.reshape(M, E).astype(jnp.bfloat16)

    kernel = functools.partial(block_kernel, batch_per_block=BB, seq_len=T,
                               num_heads=num_heads, head_size=head_size)

    weights = (wqkv, wp, bp, w1, b1, w2, b2)
    # Constant index_map -> weights stay VMEM-resident across grid steps.
    weight_specs = [pl.BlockSpec(w.shape, lambda i: (0, 0)) for w in weights]

    flops = int(2 * M * E * 3 * Hhs                       # fused qkv proj
                + 4 * B * num_heads * T * T * head_size   # scores + PV
                + 2 * M * Hhs * E                         # output projection
                + 2 * M * E * HID + 2 * M * HID * e_pad)  # feed-forward
    transcendentals = int(B * num_heads * T * (T + 1))    # exp + reciprocal
    bytes_accessed = int(x_flat.size * 2
                         + sum(int(w.size) * w.dtype.itemsize for w in weights)
                         + M * e_pad * 4)

    out_flat = pl.pallas_call(
        kernel,
        out_shape=jax.ShapeDtypeStruct((M, e_pad), jnp.float32),
        grid=(num_batch_blocks,),
        in_specs=[pl.BlockSpec((rows_per_block, E), lambda i: (i, 0))]
                 + weight_specs,
        out_specs=pl.BlockSpec((rows_per_block, e_pad), lambda i: (i, 0)),
        scratch_shapes=[pltpu.VMEM((rows_per_block, Hhs), jnp.float32)],
        compiler_params=pltpu.CompilerParams(
            dimension_semantics=("parallel",)),
        cost_estimate=pl.CostEstimate(flops=flops,
                                      transcendentals=transcendentals,
                                      bytes_accessed=bytes_accessed),
    )(x_flat, *weights)

    return out_flat[:, :E].reshape(B, T, E)


def reference_forward(x, params, *, num_heads, head_size, num_embds):
    """Pure-JAX f32 reference with the PyTorch module's semantics."""
    wq, wk, wv, wp, bp, w1, b1, w2, b2 = params
    B, T, E = x.shape
    scale = float(num_embds) ** -0.5
    q_all = x @ wq
    k_all = x @ wk
    v_all = x @ wv
    causal = jnp.tril(jnp.ones((T, T), bool))
    outs = []
    for h in range(num_heads):
        s = h * head_size
        q, k, v = (a[..., s:s + head_size] for a in (q_all, k_all, v_all))
        wei = jnp.einsum("btd,bsd->bts", q, k) * scale
        wei = jnp.where(causal, wei, -jnp.inf)
        wei = jax.nn.softmax(wei, axis=-1)
        outs.append(jnp.einsum("bts,bsd->btd", wei, v))
    cat = jnp.concatenate(outs, axis=-1)
    proj = cat @ wp + bp
    h1 = jnp.maximum(proj @ w1 + b1, 0.0)
    return jnp.maximum(h1 @ w2 + b2, 0.0)


if __name__ == "__main__":
    # Small shapes consistent with the module.
    B, T = 2, 8
    num_heads, head_size, num_embds, context_size = 4, 8, 32, 8
    H_TOT = num_heads * head_size          # 32
    HID = num_embds * 4                    # 128

    key = jax.random.PRNGKey(0)
    keys = jax.random.split(key, 10)
    std = 0.02

    # Deterministic synthetic parameters: weights (in, out), biases (1, out).
    wq = std * jax.random.normal(keys[0], (num_embds, H_TOT), jnp.float32)
    wk = std * jax.random.normal(keys[1], (num_embds, H_TOT), jnp.float32)
    wv = std * jax.random.normal(keys[2], (num_embds, H_TOT), jnp.float32)
    wp = std * jax.random.normal(keys[3], (H_TOT, num_embds), jnp.float32)
    bp = std * jax.random.normal(keys[4], (1, num_embds), jnp.float32)
    w1 = std * jax.random.normal(keys[5], (num_embds, HID), jnp.float32)
    b1 = std * jax.random.normal(keys[6], (1, HID), jnp.float32)
    w2 = std * jax.random.normal(keys[7], (HID, num_embds), jnp.float32)
    b2 = std * jax.random.normal(keys[8], (1, num_embds), jnp.float32)
    params = (wq, wk, wv, wp, bp, w1, b1, w2, b2)

    x = jax.random.normal(keys[9], (B, T, num_embds), jnp.float32)

    # One-time weight preprocessing (out of the per-call hot path).
    prepped = prepare_block_params(params, num_embds=num_embds)

    out = block_forward(x, prepped, num_heads=num_heads,
                        head_size=head_size, num_embds=num_embds,
                        num_batch_blocks=1)
    out = jax.block_until_ready(out)

    ref = reference_forward(x, params, num_heads=num_heads,
                            head_size=head_size, num_embds=num_embds)
    assert out.shape == (B, T, num_embds)
    # Tolerance loosened vs. the f32 reference because MXU inputs are bf16
    # (accumulation stays f32 via preferred_element_type) and the softmax
    # denominator uses the approximate EUP reciprocal.
    assert jnp.allclose(out, ref, atol=1e-2, rtol=1e-2), (
        float(jnp.max(jnp.abs(out - ref))))

    print("KERNEL_OK")
</pallas_src>

<mosaic_0001>
module attributes {stable_mosaic.version = 11 : i64} {
  func.func @block_kernel(%arg0: i32, %arg1: memref<16x32xbf16, #tpu.memory_space<vmem>>, %arg2: memref<32x96xbf16, #tpu.memory_space<vmem>>, %arg3: memref<32x32xbf16, #tpu.memory_space<vmem>>, %arg4: memref<1x32xf32, #tpu.memory_space<vmem>>, %arg5: memref<32x128xbf16, #tpu.memory_space<vmem>>, %arg6: memref<1x128xf32, #tpu.memory_space<vmem>>, %arg7: memref<128x128xbf16, #tpu.memory_space<vmem>>, %arg8: memref<1x128xf32, #tpu.memory_space<vmem>>, %arg9: memref<16x128xf32, #tpu.memory_space<vmem>>, %arg10: memref<16x32xf32, #tpu.memory_space<vmem>>) attributes {dimension_semantics = [#tpu.dimension_semantics<parallel>], iteration_bounds = array<i64: 1>, scalar_prefetch = 0 : i64, scratch_operands = 1 : i64, tpu.core_type = #tpu.core_type<tc>, window_params = [{transform_indices = @transform_0, window_bounds = array<i64: 16, 32>}, {pipeline_mode = #tpu.pipeline_mode<synchronous>, transform_indices = @transform_1, window_bounds = array<i64: 32, 96>}, {pipeline_mode = #tpu.pipeline_mode<synchronous>, transform_indices = @transform_2, window_bounds = array<i64: 32, 32>}, {pipeline_mode = #tpu.pipeline_mode<synchronous>, transform_indices = @transform_3, window_bounds = array<i64: 1, 32>}, {pipeline_mode = #tpu.pipeline_mode<synchronous>, transform_indices = @transform_4, window_bounds = array<i64: 32, 128>}, {pipeline_mode = #tpu.pipeline_mode<synchronous>, transform_indices = @transform_5, window_bounds = array<i64: 1, 128>}, {pipeline_mode = #tpu.pipeline_mode<synchronous>, transform_indices = @transform_6, window_bounds = array<i64: 128, 128>}, {pipeline_mode = #tpu.pipeline_mode<synchronous>, transform_indices = @transform_7, window_bounds = array<i64: 1, 128>}, {transform_indices = @transform_8, window_bounds = array<i64: 16, 128>}]} {
    %c0 = arith.constant 0 : index
    %c0_0 = arith.constant 0 : index
    %0 = vector.load %arg1[%c0, %c0_0] : memref<16x32xbf16, #tpu.memory_space<vmem>>, vector<16x32xbf16>
    %c0_1 = arith.constant 0 : index
    %c0_2 = arith.constant 0 : index
    %1 = vector.load %arg2[%c0_1, %c0_2] : memref<32x96xbf16, #tpu.memory_space<vmem>>, vector<32x96xbf16>
    %cst = arith.constant dense<0.000000e+00> : vector<16x96xf32>
    %2 = tpu.matmul %0, %1, %cst {dimension_numbers = #tpu.dot_dimension_numbers<[1], [0], [0], [1], [0, 0, 1, 1], [], []>} : vector<16x32xbf16>, vector<32x96xbf16>, vector<16x96xf32> -> vector<16x96xf32>
    %3 = arith.truncf %2 : vector<16x96xf32> to vector<16x96xbf16>
    %4 = vector.shape_cast %3 : vector<16x96xbf16> to vector<2x8x96xbf16>
    %5 = tpu.iota {dimensions = array<i32: 0>} : vector<8x8xi32>
    %6 = tpu.iota {dimensions = array<i32: 1>} : vector<8x8xi32>
    %7 = arith.cmpi sle, %6, %5 : vector<8x8xi32>
    %8 = vector.shape_cast %7 : vector<8x8xi1> to vector<1x8x8xi1>
    %9 = vector.extract_strided_slice %4 {offsets = [0, 0, 0], sizes = [2, 8, 8], strides = [1, 1, 1]} : vector<2x8x96xbf16> to vector<2x8x8xbf16>
    %10 = vector.extract_strided_slice %4 {offsets = [0, 0, 32], sizes = [2, 8, 8], strides = [1, 1, 1]} : vector<2x8x96xbf16> to vector<2x8x8xbf16>
    %11 = vector.extract_strided_slice %4 {offsets = [0, 0, 64], sizes = [2, 8, 8], strides = [1, 1, 1]} : vector<2x8x96xbf16> to vector<2x8x8xbf16>
    "tpu.trace_start"() <{level = 10 : i32, message = "btd,bsd->bts"}> : () -> ()
    %cst_3 = arith.constant dense<0.000000e+00> : vector<2x8x8xf32>
    %12 = tpu.matmul %9, %10, %cst_3 {dimension_numbers = #tpu.dot_dimension_numbers<[2], [2], [1], [1], [0, 0, 0, 1, 1, 1], [0], [0]>} : vector<2x8x8xbf16>, vector<2x8x8xbf16>, vector<2x8x8xf32> -> vector<2x8x8xf32>
    %cst_4 = arith.constant -1.000000e+30 : f32
    "tpu.trace_stop"() : () -> ()
    %13 = vector.shape_cast %8 : vector<1x8x8xi1> to vector<1x8x8xi1>
    %14 = vector.broadcast %13 : vector<1x8x8xi1> to vector<2x8x8xi1>
    %15 = vector.broadcast %cst_4 : f32 to vector<2x8x8xf32>
    %16 = arith.select %14, %12, %15 : vector<2x8x8xi1>, vector<2x8x8xf32>
    %cst_5 = arith.constant dense<0xFF800000> : vector<2x8xf32>
    %17 = vector.multi_reduction <maximumf>, %16, %cst_5 [2] : vector<2x8x8xf32> to vector<2x8xf32>
    %18 = vector.shape_cast %17 : vector<2x8xf32> to vector<2x8x1xf32>
    %19 = vector.broadcast %18 : vector<2x8x1xf32> to vector<2x8x8xf32>
    %20 = arith.subf %16, %19 : vector<2x8x8xf32>
    %21 = math.exp %20 : vector<2x8x8xf32>
    %cst_6 = arith.constant dense<0.000000e+00> : vector<2x8xf32>
    %22 = vector.multi_reduction <add>, %21, %cst_6 [2] : vector<2x8x8xf32> to vector<2x8xf32>
    %23 = vector.shape_cast %22 : vector<2x8xf32> to vector<2x8x1xf32>
    %24 = tpu.reciprocal %23 {approx = true} : vector<2x8x1xf32> -> vector<2x8x1xf32>
    %25 = vector.broadcast %24 : vector<2x8x1xf32> to vector<2x8x8xf32>
    %26 = arith.mulf %21, %25 : vector<2x8x8xf32>
    %27 = arith.truncf %26 : vector<2x8x8xf32> to vector<2x8x8xbf16>
    "tpu.trace_start"() <{level = 10 : i32, message = "bts,bsd->btd"}> : () -> ()
    %cst_7 = arith.constant dense<0.000000e+00> : vector<2x8x8xf32>
    %28 = tpu.matmul %27, %11, %cst_7 {dimension_numbers = #tpu.dot_dimension_numbers<[2], [1], [1], [2], [0, 0, 0, 1, 1, 2], [0], [0]>} : vector<2x8x8xbf16>, vector<2x8x8xbf16>, vector<2x8x8xf32> -> vector<2x8x8xf32>
    "tpu.trace_stop"() : () -> ()
    %29 = vector.shape_cast %28 : vector<2x8x8xf32> to vector<16x8xf32>
    %c0_8 = arith.constant 0 : index
    %c0_9 = arith.constant 0 : index
    %30 = vector.load %arg10[%c0_8, %c0_9] : memref<16x32xf32, #tpu.memory_space<vmem>>, vector<16x8xf32>
    tpu.vector_store %arg10[%c0_8, %c0_9], %29 {strides = array<i32>} : memref<16x32xf32, #tpu.memory_space<vmem>>, vector<16x8xf32>,
    %31 = vector.extract_strided_slice %4 {offsets = [0, 0, 8], sizes = [2, 8, 8], strides = [1, 1, 1]} : vector<2x8x96xbf16> to vector<2x8x8xbf16>
    %32 = vector.extract_strided_slice %4 {offsets = [0, 0, 40], sizes = [2, 8, 8], strides = [1, 1, 1]} : vector<2x8x96xbf16> to vector<2x8x8xbf16>
    %33 = vector.extract_strided_slice %4 {offsets = [0, 0, 72], sizes = [2, 8, 8], strides = [1, 1, 1]} : vector<2x8x96xbf16> to vector<2x8x8xbf16>
    "tpu.trace_start"() <{level = 10 : i32, message = "btd,bsd->bts"}> : () -> ()
    %cst_10 = arith.constant dense<0.000000e+00> : vector<2x8x8xf32>
    %34 = tpu.matmul %31, %32, %cst_10 {dimension_numbers = #tpu.dot_dimension_numbers<[2], [2], [1], [1], [0, 0, 0, 1, 1, 1], [0], [0]>} : vector<2x8x8xbf16>, vector<2x8x8xbf16>, vector<2x8x8xf32> -> vector<2x8x8xf32>
    %cst_11 = arith.constant -1.000000e+30 : f32
    "tpu.trace_stop"() : () -> ()
    %35 = vector.shape_cast %8 : vector<1x8x8xi1> to vector<1x8x8xi1>
    %36 = vector.broadcast %35 : vector<1x8x8xi1> to vector<2x8x8xi1>
    %37 = vector.broadcast %cst_11 : f32 to vector<2x8x8xf32>
    %38 = arith.select %36, %34, %37 : vector<2x8x8xi1>, vector<2x8x8xf32>
    %cst_12 = arith.constant dense<0xFF800000> : vector<2x8xf32>
    %39 = vector.multi_reduction <maximumf>, %38, %cst_12 [2] : vector<2x8x8xf32> to vector<2x8xf32>
    %40 = vector.shape_cast %39 : vector<2x8xf32> to vector<2x8x1xf32>
    %41 = vector.broadcast %40 : vector<2x8x1xf32> to vector<2x8x8xf32>
    %42 = arith.subf %38, %41 : vector<2x8x8xf32>
    %43 = math.exp %42 : vector<2x8x8xf32>
    %cst_13 = arith.constant dense<0.000000e+00> : vector<2x8xf32>
    %44 = vector.multi_reduction <add>, %43, %cst_13 [2] : vector<2x8x8xf32> to vector<2x8xf32>
    %45 = vector.shape_cast %44 : vector<2x8xf32> to vector<2x8x1xf32>
    %46 = tpu.reciprocal %45 {approx = true} : vector<2x8x1xf32> -> vector<2x8x1xf32>
    %47 = vector.broadcast %46 : vector<2x8x1xf32> to vector<2x8x8xf32>
    %48 = arith.mulf %43, %47 : vector<2x8x8xf32>
    %49 = arith.truncf %48 : vector<2x8x8xf32> to vector<2x8x8xbf16>
    "tpu.trace_start"() <{level = 10 : i32, message = "bts,bsd->btd"}> : () -> ()
    %cst_14 = arith.constant dense<0.000000e+00> : vector<2x8x8xf32>
    %50 = tpu.matmul %49, %33, %cst_14 {dimension_numbers = #tpu.dot_dimension_numbers<[2], [1], [1], [2], [0, 0, 0, 1, 1, 2], [0], [0]>} : vector<2x8x8xbf16>, vector<2x8x8xbf16>, vector<2x8x8xf32> -> vector<2x8x8xf32>
    "tpu.trace_stop"() : () -> ()
    %51 = vector.shape_cast %50 : vector<2x8x8xf32> to vector<16x8xf32>
    %c0_15 = arith.constant 0 : index
    %c8 = arith.constant 8 : index
    %52 = vector.load %arg10[%c0_15, %c8] : memref<16x32xf32, #tpu.memory_space<vmem>>, vector<16x8xf32>
    tpu.vector_store %arg10[%c0_15, %c8], %51 {strides = array<i32>} : memref<16x32xf32, #tpu.memory_space<vmem>>, vector<16x8xf32>,
    %53 = vector.extract_strided_slice %4 {offsets = [0, 0, 16], sizes = [2, 8, 8], strides = [1, 1, 1]} : vector<2x8x96xbf16> to vector<2x8x8xbf16>
    %54 = vector.extract_strided_slice %4 {offsets = [0, 0, 48], sizes = [2, 8, 8], strides = [1, 1, 1]} : vector<2x8x96xbf16> to vector<2x8x8xbf16>
    %55 = vector.extract_strided_slice %4 {offsets = [0, 0, 80], sizes = [2, 8, 8], strides = [1, 1, 1]} : vector<2x8x96xbf16> to vector<2x8x8xbf16>
    "tpu.trace_start"() <{level = 10 : i32, message = "btd,bsd->bts"}> : () -> ()
    %cst_16 = arith.constant dense<0.000000e+00> : vector<2x8x8xf32>
    %56 = tpu.matmul %53, %54, %cst_16 {dimension_numbers = #tpu.dot_dimension_numbers<[2], [2], [1], [1], [0, 0, 0, 1, 1, 1], [0], [0]>} : vector<2x8x8xbf16>, vector<2x8x8xbf16>, vector<2x8x8xf32> -> vector<2x8x8xf32>
    %cst_17 = arith.constant -1.000000e+30 : f32
    "tpu.trace_stop"() : () -> ()
    %57 = vector.shape_cast %8 : vector<1x8x8xi1> to vector<1x8x8xi1>
    %58 = vector.broadcast %57 : vector<1x8x8xi1> to vector<2x8x8xi1>
    %59 = vector.broadcast %cst_17 : f32 to vector<2x8x8xf32>
    %60 = arith.select %58, %56, %59 : vector<2x8x8xi1>, vector<2x8x8xf32>
    %cst_18 = arith.constant dense<0xFF800000> : vector<2x8xf32>
    %61 = vector.multi_reduction <maximumf>, %60, %cst_18 [2] : vector<2x8x8xf32> to vector<2x8xf32>
    %62 = vector.shape_cast %61 : vector<2x8xf32> to vector<2x8x1xf32>
    %63 = vector.broadcast %62 : vector<2x8x1xf32> to vector<2x8x8xf32>
    %64 = arith.subf %60, %63 : vector<2x8x8xf32>
    %65 = math.exp %64 : vector<2x8x8xf32>
    %cst_19 = arith.constant dense<0.000000e+00> : vector<2x8xf32>
    %66 = vector.multi_reduction <add>, %65, %cst_19 [2] : vector<2x8x8xf32> to vector<2x8xf32>
    %67 = vector.shape_cast %66 : vector<2x8xf32> to vector<2x8x1xf32>
    %68 = tpu.reciprocal %67 {approx = true} : vector<2x8x1xf32> -> vector<2x8x1xf32>
    %69 = vector.broadcast %68 : vector<2x8x1xf32> to vector<2x8x8xf32>
    %70 = arith.mulf %65, %69 : vector<2x8x8xf32>
    %71 = arith.truncf %70 : vector<2x8x8xf32> to vector<2x8x8xbf16>
    "tpu.trace_start"() <{level = 10 : i32, message = "bts,bsd->btd"}> : () -> ()
    %cst_20 = arith.constant dense<0.000000e+00> : vector<2x8x8xf32>
    %72 = tpu.matmul %71, %55, %cst_20 {dimension_numbers = #tpu.dot_dimension_numbers<[2], [1], [1], [2], [0, 0, 0, 1, 1, 2], [0], [0]>} : vector<2x8x8xbf16>, vector<2x8x8xbf16>, vector<2x8x8xf32> -> vector<2x8x8xf32>
    "tpu.trace_stop"() : () -> ()
    %73 = vector.shape_cast %72 : vector<2x8x8xf32> to vector<16x8xf32>
    %c0_21 = arith.constant 0 : index
    %c16 = arith.constant 16 : index
    %74 = vector.load %arg10[%c0_21, %c16] : memref<16x32xf32, #tpu.memory_space<vmem>>, vector<16x8xf32>
    tpu.vector_store %arg10[%c0_21, %c16], %73 {strides = array<i32>} : memref<16x32xf32, #tpu.memory_space<vmem>>, vector<16x8xf32>,
    %75 = vector.extract_strided_slice %4 {offsets = [0, 0, 24], sizes = [2, 8, 8], strides = [1, 1, 1]} : vector<2x8x96xbf16> to vector<2x8x8xbf16>
    %76 = vector.extract_strided_slice %4 {offsets = [0, 0, 56], sizes = [2, 8, 8], strides = [1, 1, 1]} : vector<2x8x96xbf16> to vector<2x8x8xbf16>
    %77 = vector.extract_strided_slice %4 {offsets = [0, 0, 88], sizes = [2, 8, 8], strides = [1, 1, 1]} : vector<2x8x96xbf16> to vector<2x8x8xbf16>
    "tpu.trace_start"() <{level = 10 : i32, message = "btd,bsd->bts"}> : () -> ()
    %cst_22 = arith.constant dense<0.000000e+00> : vector<2x8x8xf32>
    %78 = tpu.matmul %75, %76, %cst_22 {dimension_numbers = #tpu.dot_dimension_numbers<[2], [2], [1], [1], [0, 0, 0, 1, 1, 1], [0], [0]>} : vector<2x8x8xbf16>, vector<2x8x8xbf16>, vector<2x8x8xf32> -> vector<2x8x8xf32>
    %cst_23 = arith.constant -1.000000e+30 : f32
    "tpu.trace_stop"() : () -> ()
    %79 = vector.shape_cast %8 : vector<1x8x8xi1> to vector<1x8x8xi1>
    %80 = vector.broadcast %79 : vector<1x8x8xi1> to vector<2x8x8xi1>
    %81 = vector.broadcast %cst_23 : f32 to vector<2x8x8xf32>
    %82 = arith.select %80, %78, %81 : vector<2x8x8xi1>, vector<2x8x8xf32>
    %cst_24 = arith.constant dense<0xFF800000> : vector<2x8xf32>
    %83 = vector.multi_reduction <maximumf>, %82, %cst_24 [2] : vector<2x8x8xf32> to vector<2x8xf32>
    %84 = vector.shape_cast %83 : vector<2x8xf32> to vector<2x8x1xf32>
    %85 = vector.broadcast %84 : vector<2x8x1xf32> to vector<2x8x8xf32>
    %86 = arith.subf %82, %85 : vector<2x8x8xf32>
    %87 = math.exp %86 : vector<2x8x8xf32>
    %cst_25 = arith.constant dense<0.000000e+00> : vector<2x8xf32>
    %88 = vector.multi_reduction <add>, %87, %cst_25 [2] : vector<2x8x8xf32> to vector<2x8xf32>
    %89 = vector.shape_cast %88 : vector<2x8xf32> to vector<2x8x1xf32>
    %90 = tpu.reciprocal %89 {approx = true} : vector<2x8x1xf32> -> vector<2x8x1xf32>
    %91 = vector.broadcast %90 : vector<2x8x1xf32> to vector<2x8x8xf32>
    %92 = arith.mulf %87, %91 : vector<2x8x8xf32>
    %93 = arith.truncf %92 : vector<2x8x8xf32> to vector<2x8x8xbf16>
    "tpu.trace_start"() <{level = 10 : i32, message = "bts,bsd->btd"}> : () -> ()
    %cst_26 = arith.constant dense<0.000000e+00> : vector<2x8x8xf32>
    %94 = tpu.matmul %93, %77, %cst_26 {dimension_numbers = #tpu.dot_dimension_numbers<[2], [1], [1], [2], [0, 0, 0, 1, 1, 2], [0], [0]>} : vector<2x8x8xbf16>, vector<2x8x8xbf16>, vector<2x8x8xf32> -> vector<2x8x8xf32>
    "tpu.trace_stop"() : () -> ()
    %95 = vector.shape_cast %94 : vector<2x8x8xf32> to vector<16x8xf32>
    %c0_27 = arith.constant 0 : index
    %c24 = arith.constant 24 : index
    %96 = vector.load %arg10[%c0_27, %c24] : memref<16x32xf32, #tpu.memory_space<vmem>>, vector<16x8xf32>
    tpu.vector_store %arg10[%c0_27, %c24], %95 {strides = array<i32>} : memref<16x32xf32, #tpu.memory_space<vmem>>, vector<16x8xf32>,
    %c0_28 = arith.constant 0 : index
    %c0_29 = arith.constant 0 : index
    %97 = vector.load %arg10[%c0_28, %c0_29] : memref<16x32xf32, #tpu.memory_space<vmem>>, vector<16x32xf32>
    %98 = arith.truncf %97 : vector<16x32xf32> to vector<16x32xbf16>
    %c0_30 = arith.constant 0 : index
    %c0_31 = arith.constant 0 : index
    %99 = vector.load %arg3[%c0_30, %c0_31] : memref<32x32xbf16, #tpu.memory_space<vmem>>, vector<32x32xbf16>
    %cst_32 = arith.constant dense<0.000000e+00> : vector<16x32xf32>
    %100 = tpu.matmul %98, %99, %cst_32 {dimension_numbers = #tpu.dot_dimension_numbers<[1], [0], [0], [1], [0, 0, 1, 1], [], []>} : vector<16x32xbf16>, vector<32x32xbf16>, vector<16x32xf32> -> vector<16x32xf32>
    %c0_33 = arith.constant 0 : index
    %c0_34 = arith.constant 0 : index
    %101 = vector.load %arg4[%c0_33, %c0_34] : memref<1x32xf32, #tpu.memory_space<vmem>>, vector<1x32xf32>
    %102 = vector.broadcast %101 : vector<1x32xf32> to vector<16x32xf32>
    %103 = arith.addf %100, %102 : vector<16x32xf32>
    %104 = arith.truncf %103 : vector<16x32xf32> to vector<16x32xbf16>
    %c0_35 = arith.constant 0 : index
    %c0_36 = arith.constant 0 : index
    %105 = vector.load %arg5[%c0_35, %c0_36] : memref<32x128xbf16, #tpu.memory_space<vmem>>, vector<32x128xbf16>
    %cst_37 = arith.constant dense<0.000000e+00> : vector<16x128xf32>
    %106 = tpu.matmul %104, %105, %cst_37 {dimension_numbers = #tpu.dot_dimension_numbers<[1], [0], [0], [1], [0, 0, 1, 1], [], []>} : vector<16x32xbf16>, vector<32x128xbf16>, vector<16x128xf32> -> vector<16x128xf32>
    %c0_38 = arith.constant 0 : index
    %c0_39 = arith.constant 0 : index
    %107 = vector.load %arg6[%c0_38, %c0_39] : memref<1x128xf32, #tpu.memory_space<vmem>>, vector<1x128xf32>
    %108 = vector.broadcast %107 : vector<1x128xf32> to vector<16x128xf32>
    %109 = arith.addf %106, %108 : vector<16x128xf32>
    %cst_40 = arith.constant 0.000000e+00 : f32
    %110 = vector.broadcast %cst_40 : f32 to vector<16x128xf32>
    %111 = arith.maximumf %109, %110 : vector<16x128xf32>
    %112 = arith.truncf %111 : vector<16x128xf32> to vector<16x128xbf16>
    %c0_41 = arith.constant 0 : index
    %c0_42 = arith.constant 0 : index
    %113 = vector.load %arg7[%c0_41, %c0_42] : memref<128x128xbf16, #tpu.memory_space<vmem>>, vector<128x128xbf16>
    %cst_43 = arith.constant dense<0.000000e+00> : vector<16x128xf32>
    %114 = tpu.matmul %112, %113, %cst_43 {dimension_numbers = #tpu.dot_dimension_numbers<[1], [0], [0], [1], [0, 0, 1, 1], [], []>} : vector<16x128xbf16>, vector<128x128xbf16>, vector<16x128xf32> -> vector<16x128xf32>
    %c0_44 = arith.constant 0 : index
    %c0_45 = arith.constant 0 : index
    %115 = vector.load %arg8[%c0_44, %c0_45] : memref<1x128xf32, #tpu.memory_space<vmem>>, vector<1x128xf32>
    %116 = vector.broadcast %115 : vector<1x128xf32> to vector<16x128xf32>
    %117 = arith.addf %114, %116 : vector<16x128xf32>
    %cst_46 = arith.constant 0.000000e+00 : f32
    %118 = vector.broadcast %cst_46 : f32 to vector<16x128xf32>
    %119 = arith.maximumf %117, %118 : vector<16x128xf32>
    %c0_47 = arith.constant 0 : index
    %c0_48 = arith.constant 0 : index
    %120 = vector.load %arg9[%c0_47, %c0_48] : memref<16x128xf32, #tpu.memory_space<vmem>>, vector<16x128xf32>
    tpu.vector_store %arg9[%c0_47, %c0_48], %119 {strides = array<i32>} : memref<16x128xf32, #tpu.memory_space<vmem>>, vector<16x128xf32>,
    return
  }
  func.func @transform_0(%arg0: i32) -> (i32, i32) {
    %c0_i32 = arith.constant 0 : i32
    %c0_i32_0 = arith.constant 0 : i32
    return %arg0, %c0_i32 : i32, i32
  }
  func.func @transform_1(%arg0: i32) -> (i32, i32) {
    %c0_i32 = arith.constant 0 : i32
    %c0_i32_0 = arith.constant 0 : i32
    %c0_i32_1 = arith.constant 0 : i32
    return %c0_i32, %c0_i32_0 : i32, i32
  }
  func.func @transform_2(%arg0: i32) -> (i32, i32) {
    %c0_i32 = arith.constant 0 : i32
    %c0_i32_0 = arith.constant 0 : i32
    %c0_i32_1 = arith.constant 0 : i32
    return %c0_i32, %c0_i32_0 : i32, i32
  }
  func.func @transform_3(%arg0: i32) -> (i32, i32) {
    %c0_i32 = arith.constant 0 : i32
    %c0_i32_0 = arith.constant 0 : i32
    %c0_i32_1 = arith.constant 0 : i32
    return %c0_i32, %c0_i32_0 : i32, i32
  }
  func.func @transform_4(%arg0: i32) -> (i32, i32) {
    %c0_i32 = arith.constant 0 : i32
    %c0_i32_0 = arith.constant 0 : i32
    %c0_i32_1 = arith.constant 0 : i32
    return %c0_i32, %c0_i32_0 : i32, i32
  }
  func.func @transform_5(%arg0: i32) -> (i32, i32) {
    %c0_i32 = arith.constant 0 : i32
    %c0_i32_0 = arith.constant 0 : i32
    %c0_i32_1 = arith.constant 0 : i32
    return %c0_i32, %c0_i32_0 : i32, i32
  }
  func.func @transform_6(%arg0: i32) -> (i32, i32) {
    %c0_i32 = arith.constant 0 : i32
    %c0_i32_0 = arith.constant 0 : i32
    %c0_i32_1 = arith.constant 0 : i32
    return %c0_i32, %c0_i32_0 : i32, i32
  }
  func.func @transform_7(%arg0: i32) -> (i32, i32) {
    %c0_i32 = arith.constant 0 : i32
    %c0_i32_0 = arith.constant 0 : i32
    %c0_i32_1 = arith.constant 0 : i32
    return %c0_i32, %c0_i32_0 : i32, i32
  }
  func.func @transform_8(%arg0: i32) -> (i32, i32) {
    %c0_i32 = arith.constant 0 : i32
    %c0_i32_0 = arith.constant 0 : i32
    return %arg0, %c0_i32 : i32, i32
  }
}

</mosaic_0001>

<llo_original>
// kernel: block_forward.1
$region0: #{block_forward.1}
  #allocation0 [shape = 'u32[]', space=smem, size = 0x4, offset = 0x4, fixed_abs, tag = 'smem constant byte address 0x4 - core index']
  #allocation1 [shape = 'u32[144,128]{1,0:T(1,128)}', space=vmem, size = 0x12000, scoped, tag = 'internal scratch']
  #allocation2 [shape = 'f32[16,32]{1,0:T(8,128)}', space=vmem, size = 0x2000, scoped, tag = 'scratch operand']
  %s0 = inlined_call_operand.vmem [shape: bf16[16,32], index: 0, kind: input, shape index: {}]
  %s1 = inlined_call_operand.vmem [shape: bf16[32,96], index: 1, kind: input, shape index: {}]
  %s2 = inlined_call_operand.hbm [shape: bf16[32,32], index: 2, kind: input, shape index: {}]
  %s3 = inlined_call_operand.vmem [shape: f32[1,32], index: 3, kind: input, shape index: {}]
  %s4 = inlined_call_operand.hbm [shape: bf16[32,128], index: 4, kind: input, shape index: {}]
  %s5 = inlined_call_operand.vmem [shape: f32[1,128], index: 5, kind: input, shape index: {}]
  %s6 = inlined_call_operand.hbm [shape: bf16[128,128], index: 6, kind: input, shape index: {}]
  %s7 = inlined_call_operand.vmem [shape: f32[1,128], index: 7, kind: input, shape index: {}]
  %s8 = inlined_call_operand.vmem [shape: f32[16,128], index: 8, kind: output, shape index: {}]
  %s9 = sld [smem:[#allocation0]]
  $region54: #{block_forward.1} parent=0
    _
  %s11 = ssub.s32 1, %s9
  %s12 = scalar_select 0, %s11, %s9
  $region1: #{block_forward.1} parent=0
    #allocation3 [shape = 'u8[8192]{0}', space=vmem, size = 0x2000, scoped, tag = 'input window, operand 2, single buffered']
    #allocation4 [shape = 's32[1]{0}', space=sflag, size = 0x4, scoped, tag = 'scoped memory for block_forward.1']
    #allocation5 [shape = 'u8[8192]{0}', space=vmem, size = 0x2000, scoped, tag = 'input window, operand 4, single buffered']
    #allocation6 [shape = 's32[1]{0}', space=sflag, size = 0x4, scoped, tag = 'scoped memory for block_forward.1']
    #allocation7 [shape = 'u8[32768]{0}', space=vmem, size = 0x8000, scoped, tag = 'input window, operand 6, single buffered']
    %13 = vsyncpa [#allocation4], 0
    %14 = vsyncpa [#allocation6], 0
    // Predicated region
    $region2: #{block_forward.1} parent=1 // pred_check
      _
    $region3: #{block_forward.1} parent=1 // pred_check_branch
      %16 = sbr.rel (0) target = $region5
    $region4: #{block_forward.1} parent=1 // pred_region
      _
    $region5: #{block_forward.1} parent=1 // pred_fallthru
      _
    // Predicated region
    $region6: #{block_forward.1} parent=1 // pred_check
      _
    $region7: #{block_forward.1} parent=1 // pred_check_branch
      %18 = sbr.rel (0) target = $region9
    $region8: #{block_forward.1} parent=1 // pred_region
      _
    $region9: #{block_forward.1} parent=1 // pred_fallthru
      _
    // Predicated region
    $region10: #{block_forward.1} parent=1 // pred_check
      _
    $region11: #{block_forward.1} parent=1 // pred_check_branch
      %20 = sbr.rel (0) target = $region13
    $region12: #{block_forward.1} parent=1 // pred_region
      %s22 = ssub.s32 256, 256
      %23 = vsyncadd [#allocation4], %s22
      %s24 = sshll.u32 [#allocation3], 4
      %s25 = int_to_ptr.vmem [resolvable:$true] %s24
      %30 = dma.hbm_to_vmem [thread:$0]  %s2, 256, %s25, [#allocation4], 64, 64, 4
    $region13: #{block_forward.1} parent=1 // pred_fallthru
      _
    // Predicated region
    $region14: #{block_forward.1} parent=1 // pred_check
      _
    $region15: #{block_forward.1} parent=1 // pred_check_branch
      %32 = sbr.rel (0) target = $region17
    $region16: #{block_forward.1} parent=1 // pred_region
      _
    $region17: #{block_forward.1} parent=1 // pred_fallthru
      _
    // Predicated region
    $region18: #{block_forward.1} parent=1 // pred_check
      _
    $region19: #{block_forward.1} parent=1 // pred_check_branch
      %34 = sbr.rel (0) target = $region21
    $region20: #{block_forward.1} parent=1 // pred_region
      %s36 = ssub.s32 256, 256
      %37 = vsyncadd [#allocation6], %s36
      %s38 = sshll.u32 [#allocation5], 4
      %s39 = int_to_ptr.vmem [resolvable:$true] %s38
      %44 = dma.hbm_to_vmem [thread:$0]  %s4, 256, %s39, [#allocation6], 64, 64, 4
    $region21: #{block_forward.1} parent=1 // pred_fallthru
      _
    // Predicated region
    $region22: #{block_forward.1} parent=1 // pred_check
      _
    $region23: #{block_forward.1} parent=1 // pred_check_branch
      %46 = sbr.rel (0) target = $region25
    $region24: #{block_forward.1} parent=1 // pred_region
      _
    $region25: #{block_forward.1} parent=1 // pred_fallthru
      _
    // Predicated region
    $region26: #{block_forward.1} parent=1 // pred_check
      _
    $region27: #{block_forward.1} parent=1 // pred_check_branch
      %48 = sbr.rel (0) target = $region29
    $region28: #{block_forward.1} parent=1 // pred_region
      %s50 = ssub.s32 1024, 1024
      %51 = vsyncadd [#allocation6], %s50
      %s52 = sshll.u32 [#allocation7], 4
      %s53 = int_to_ptr.vmem [resolvable:$true] %s52
      %58 = dma.hbm_to_vmem [thread:$0]  %s6, 1024, %s53, [#allocation6], 64, 64, 4
    $region29: #{block_forward.1} parent=1 // pred_fallthru
      _
    // Predicated region
    $region30: #{block_forward.1} parent=1 // pred_check
      _
    $region31: #{block_forward.1} parent=1 // pred_check_branch
      %60 = sbr.rel (0) target = $region33
    $region32: #{block_forward.1} parent=1 // pred_region
      _
    $region33: #{block_forward.1} parent=1 // pred_fallthru
      _
    // Predicated region
    $region34: #{block_forward.1} parent=1 // pred_check
      _
    $region35: #{block_forward.1} parent=1 // pred_check_branch
      %62 = sbr.rel (0) target = $region37
    $region36: #{block_forward.1} parent=1 // pred_region
      %63 = dma.done [#allocation4], 256
    $region37: #{block_forward.1} parent=1 // pred_fallthru
      _
    // Predicated region
    $region38: #{block_forward.1} parent=1 // pred_check
      _
    $region39: #{block_forward.1} parent=1 // pred_check_branch
      %65 = sbr.rel (0) target = $region41
    $region40: #{block_forward.1} parent=1 // pred_region
      %66 = dma.done [#allocation6], 256
    $region41: #{block_forward.1} parent=1 // pred_fallthru
      _
    // Predicated region
    $region42: #{block_forward.1} parent=1 // pred_check
      _
    $region43: #{block_forward.1} parent=1 // pred_check_branch
      %68 = sbr.rel (0) target = $region45
    $region44: #{block_forward.1} parent=1 // pred_region
      %69 = dma.done [#allocation6], 1024
    $region45: #{block_forward.1} parent=1 // pred_fallthru
      _
    %v71 = vld [vmem:[%s0] sm:$0xf]
    %v72 = vld [vmem:[%s0 + $0x4] sm:$0xf]
    %v73 = vld [vmem:[%s1] sm:$0xf]
    %v74 = vld [vmem:[%s1 + $0x4] sm:$0xf]
    %v75 = vld [vmem:[%s1 + $0x8] sm:$0xf]
    %v76 = vld [vmem:[%s1 + $0xc] sm:$0xf]
    %v79 = vunpack.c.l.b16 %v71
    %v80 = vunpack.c.l.b16 %v72
    %v81 = vpack.c.b16 %v80, %v79
    %v86 = vunpack.c.l.b16 %v73
    %v87 = vunpack.c.l.b16 %v74
    %v88 = vunpack.c.l.b16 %v75
    %v89 = vunpack.c.l.b16 %v76
    %v90 = vpack.c.b16 %v87, %v86
    %v91 = vpack.c.b16 %v89, %v88
    %vm94 = vcmask 261120
    %v96 = vsel %vm94, %v81, 0
    %98 = vmatprep.subr.bf16.mxu0 0
    %99 = vmatpush1.bf16.msra.mxu0 0
    %100 = vmatprep.subr.bf16.mxu0 0
    %101 = vmatpush1.bf16.msra.mxu0 0
    %102 = vmatprep.subr.bf16.mxu0 0
    %103 = vmatpush1.bf16.msra.mxu0 0
    %104 = vmatprep.subr.bf16.mxu0 0
    %105 = vmatpush1.bf16.msra.mxu0 0
    %106 = vmatprep.subr.bf16.mxu0 0
    %107 = vmatpush1.bf16.msra.mxu0 0
    %108 = vmatprep.subr.bf16.mxu0 0
    %109 = vmatpush1.bf16.msra.mxu0 0
    %110 = vmatprep.subr.bf16.mxu0 0
    %111 = vmatpush1.bf16.msra.mxu0 %v91
    %112 = vmatprep.subr.bf16.mxu0 0
    %113 = vmatpush1.bf16.msra.mxu0 %v90
    %114 = vmatprep.subr.bf16.mxu0 0
    %115 = vmatpush2.bf16.msra.mxu0 0
    %116 = vmatprep.subr.bf16.mxu0 0
    %117 = vmatpush2.bf16.msra.mxu0 0
    %118 = vmatprep.subr.bf16.mxu0 0
    %119 = vmatpush2.bf16.msra.mxu0 0
    %120 = vmatprep.subr.bf16.mxu0 0
    %121 = vmatpush2.bf16.msra.mxu0 0
    %122 = vmatprep.subr.bf16.mxu0 0
    %123 = vmatpush2.bf16.msra.mxu0 0
    %124 = vmatprep.subr.bf16.mxu0 0
    %125 = vmatpush2.bf16.msra.mxu0 0
    %126 = vmatprep.subr.bf16.mxu0 0
    %127 = vmatpush2.bf16.msra.mxu0 0
    %128 = vmatprep.subr.bf16.mxu0 0
    %129 = vmatpush2.bf16.msra.mxu0 0
    %130 = vmatprep.mubr.bf16.mxu0 0
    %131 = vmatmul.mubr.bf16.gmra.mxu0 %v96
    %v132 = vpop.f32.mrf.mxu0
    %v133 = vadd.f32 0.0, %v132
    %v134 = vpop.f32.mrf.mxu0
    %v135 = vpop.f32.mrf.mxu0
    %v136 = vadd.f32 0.0, %v135
    %v137 = vpop.f32.mrf.mxu0
    %138 = vdwg.mxu0
    %v139 = vpack.c.bf16 %v136, %v133
    %v141 = vunpack.c.l.b16 %v139
    %v142 = vunpack.c.h.b16 %v139
    %v143 = vpack.c.b16 %v141, %v141
    %v144 = vpack.c.b16 %v142, %v142
    %v145 = vlaneseq
    %v146 = vshrl.u32 %v145, 7
    %v147 = vlaneseq
    %v148 = vand.u32 %v147, 127
    %vm149 = vcmp.le.s32.totalorder %v148, %v146
    %150 = vrot.lane.b32.xlu0 %v143, 96
    %v151 = vpop.permute.xlu0 %150
    %vm152 = vcmask 64512
    %v154 = vsel %vm152, %v143, 0
    %v157 = vsel %vm152, %v151, 0
    %159 = vmatprep.subr.bf16.mxu0 0
    %160 = vmatpush1.bf16.xpose.msra.mxu0 0
    %161 = vmatprep.subr.bf16.mxu0 0
    %162 = vmatpush1.bf16.xpose.msra.mxu0 0
    %163 = vmatprep.subr.bf16.mxu0 0
    %164 = vmatpush1.bf16.xpose.msra.mxu0 0
    %165 = vmatprep.subr.bf16.mxu0 0
    %166 = vmatpush1.bf16.xpose.msra.mxu0 0
    %167 = vmatprep.subr.bf16.mxu0 0
    %168 = vmatpush1.bf16.xpose.msra.mxu0 0
    %169 = vmatprep.subr.bf16.mxu0 0
    %170 = vmatpush1.bf16.xpose.msra.mxu0 0
    %171 = vmatprep.subr.bf16.mxu0 0
    %172 = vmatpush1.bf16.xpose.msra.mxu0 0
    %173 = vmatprep.subr.bf16.mxu0 0
    %174 = vmatpush1.bf16.xpose.msra.mxu0 %v157
    %175 = vmatprep.subr.bf16.mxu0 0
    %176 = vmatpush2.bf16.xpose.msra.mxu0 0
    %177 = vmatprep.subr.bf16.mxu0 0
    %178 = vmatpush2.bf16.xpose.msra.mxu0 0
    %179 = vmatprep.subr.bf16.mxu0 0
    %180 = vmatpush2.bf16.xpose.msra.mxu0 0
    %181 = vmatprep.subr.bf16.mxu0 0
    %182 = vmatpush2.bf16.xpose.msra.mxu0 0
    %183 = vmatprep.subr.bf16.mxu0 0
    %184 = vmatpush2.bf16.xpose.msra.mxu0 0
    %185 = vmatprep.subr.bf16.mxu0 0
    %186 = vmatpush2.bf16.xpose.msra.mxu0 0
    %187 = vmatprep.subr.bf16.mxu0 0
    %188 = vmatpush2.bf16.xpose.msra.mxu0 0
    %189 = vmatprep.subr.bf16.mxu0 0
    %190 = vmatpush2.bf16.xpose.msra.mxu0 0
    %191 = vmatprep.mubr.bf16.mxu0 0
    %192 = vmatmul.mubr.bf16.gmra.mxu0 %v154
    %v193 = vpop.f32.mrf.mxu0
    %v194 = vadd.f32 0.0, %v193
    %v195 = vpop.f32.mrf.mxu0
    %v196 = vpop.f32.mrf.mxu0
    %v197 = vpop.f32.mrf.mxu0
    %198 = vdwg.mxu0
    %199 = vrot.lane.b32.xlu0 %v144, 96
    %v200 = vpop.permute.xlu0 %199
    %v202 = vsel %vm152, %v144, 0
    %v205 = vsel %vm152, %v200, 0
    %207 = vmatprep.subr.bf16.mxu0 0
    %208 = vmatpush1.bf16.xpose.msra.mxu0 0
    %209 = vmatprep.subr.bf16.mxu0 0
    %210 = vmatpush1.bf16.xpose.msra.mxu0 0
    %211 = vmatprep.subr.bf16.mxu0 0
    %212 = vmatpush1.bf16.xpose.msra.mxu0 0
    %213 = vmatprep.subr.bf16.mxu0 0
    %214 = vmatpush1.bf16.xpose.msra.mxu0 0
    %215 = vmatprep.subr.bf16.mxu0 0
    %216 = vmatpush1.bf16.xpose.msra.mxu0 0
    %217 = vmatprep.subr.bf16.mxu0 0
    %218 = vmatpush1.bf16.xpose.msra.mxu0 0
    %219 = vmatprep.subr.bf16.mxu0 0
    %220 = vmatpush1.bf16.xpose.msra.mxu0 0
    %221 = vmatprep.subr.bf16.mxu0 0
    %222 = vmatpush1.bf16.xpose.msra.mxu0 %v205
    %223 = vmatprep.subr.bf16.mxu0 0
    %224 = vmatpush2.bf16.xpose.msra.mxu0 0
    %225 = vmatprep.subr.bf16.mxu0 0
    %226 = vmatpush2.bf16.xpose.msra.mxu0 0
    %227 = vmatprep.subr.bf16.mxu0 0
    %228 = vmatpush2.bf16.xpose.msra.mxu0 0
    %229 = vmatprep.subr.bf16.mxu0 0
    %230 = vmatpush2.bf16.xpose.msra.mxu0 0
    %231 = vmatprep.subr.bf16.mxu0 0
    %232 = vmatpush2.bf16.xpose.msra.mxu0 0
    %233 = vmatprep.subr.bf16.mxu0 0
    %234 = vmatpush2.bf16.xpose.msra.mxu0 0
    %235 = vmatprep.subr.bf16.mxu0 0
    %236 = vmatpush2.bf16.xpose.msra.mxu0 0
    %237 = vmatprep.subr.bf16.mxu0 0
    %238 = vmatpush2.bf16.xpose.msra.mxu0 0
    %239 = vmatprep.mubr.bf16.mxu0 0
    %240 = vmatmul.mubr.bf16.gmra.mxu0 %v202
    %v241 = vpop.f32.mrf.mxu0
    %v242 = vadd.f32 0.0, %v241
    %v243 = vpop.f32.mrf.mxu0
    %v244 = vpop.f32.mrf.mxu0
    %v245 = vpop.f32.mrf.mxu0
    %246 = vdwg.mxu0
    %v247 = vsel %vm149, 1, 0
    %vm248 = vcmp.eq.s32.totalorder %v247, 1
    %v249 = vsel %vm248, %v194, -1e+30
    %v250 = vsel %vm248, %v242, -1e+30
    %v251 = vsel %vm152, %v249, -inf
    %252 = vmax.xlane.f32.xlu0 %v251
    %v253 = vpop.xlane.xlu0 %252
    %v254 = vsel %vm152, %v250, -inf
    %255 = vmax.xlane.f32.xlu0 %v254
    %v256 = vpop.xlane.xlu0 %255
    %v257 = vsub.f32 %v249, %v253
    %v258 = vsub.f32 %v250, %v256
    %v259 = vmul.f32 %v257, 1.442695
    %v260 = vpow.pop %v259
    %v261 = vmul.f32 %v258, 1.442695
    %v262 = vpow.pop %v261
    %v263 = vsel %vm152, %v260, 0.0
    %264 = vadd.xlane.f32.xlu0 %v263
    %v265 = vpop.xlane.xlu0 %264
    %v266 = vsel %vm152, %v262, 0.0
    %267 = vadd.xlane.f32.xlu0 %v266
    %v268 = vpop.xlane.xlu0 %267
    %v269 = vrcp.pop %v265
    %v270 = vrcp.pop %v268
    %v271 = vmul.f32 %v260, %v269
    %v272 = vmul.f32 %v262, %v270
    %v273 = vpack.c.bf16 %v271, %v271
    %v274 = vpack.c.bf16 %v272, %v272
    %275 = vrot.lane.b32.xlu0 %v143, 64
    %v276 = vpop.permute.xlu0 %275
    %v278 = vsel %vm152, %v273, 0
    %vm280 = vcmask 1043456
    %v282 = vsel %vm280, %v276, 0
    %284 = vmatprep.subr.bf16.mxu0 0
    %285 = vmatpush1.bf16.msra.mxu0 0
    %286 = vmatprep.subr.bf16.mxu0 0
    %287 = vmatpush1.bf16.msra.mxu0 0
    %288 = vmatprep.subr.bf16.mxu0 0
    %289 = vmatpush1.bf16.msra.mxu0 0
    %290 = vmatprep.subr.bf16.mxu0 0
    %291 = vmatpush1.bf16.msra.mxu0 0
    %292 = vmatprep.subr.bf16.mxu0 0
    %293 = vmatpush1.bf16.msra.mxu0 0
    %294 = vmatprep.subr.bf16.mxu0 0
    %295 = vmatpush1.bf16.msra.mxu0 0
    %296 = vmatprep.subr.bf16.mxu0 0
    %297 = vmatpush1.bf16.msra.mxu0 0
    %298 = vmatprep.subr.bf16.mxu0 0
    %299 = vmatpush1.bf16.msra.mxu0 %v282
    %300 = vmatprep.subr.bf16.mxu0 0
    %301 = vmatpush2.bf16.msra.mxu0 0
    %302 = vmatprep.subr.bf16.mxu0 0
    %303 = vmatpush2.bf16.msra.mxu0 0
    %304 = vmatprep.subr.bf16.mxu0 0
    %305 = vmatpush2.bf16.msra.mxu0 0
    %306 = vmatprep.subr.bf16.mxu0 0
    %307 = vmatpush2.bf16.msra.mxu0 0
    %308 = vmatprep.subr.bf16.mxu0 0
    %309 = vmatpush2.bf16.msra.mxu0 0
    %310 = vmatprep.subr.bf16.mxu0 0
    %311 = vmatpush2.bf16.msra.mxu0 0
    %312 = vmatprep.subr.bf16.mxu0 0
    %313 = vmatpush2.bf16.msra.mxu0 0
    %314 = vmatprep.subr.bf16.mxu0 0
    %315 = vmatpush2.bf16.msra.mxu0 0
    %316 = vmatprep.mubr.bf16.mxu0 0
    %317 = vmatmul.mubr.bf16.gmra.mxu0 %v278
    %v318 = vpop.f32.mrf.mxu0
    %v319 = vadd.f32 0.0, %v318
    %v320 = vpop.f32.mrf.mxu0
    %v321 = vpop.f32.mrf.mxu0
    %v322 = vpop.f32.mrf.mxu0
    %323 = vdwg.mxu0
    %324 = vrot.lane.b32.xlu0 %v144, 64
    %v325 = vpop.permute.xlu0 %324
    %v327 = vsel %vm152, %v274, 0
    %v330 = vsel %vm280, %v325, 0
    %332 = vmatprep.subr.bf16.mxu0 0
    %333 = vmatpush1.bf16.msra.mxu0 0
    %334 = vmatprep.subr.bf16.mxu0 0
    %335 = vmatpush1.bf16.msra.mxu0 0
    %336 = vmatprep.subr.bf16.mxu0 0
    %337 = vmatpush1.bf16.msra.mxu0 0
    %338 = vmatprep.subr.bf16.mxu0 0
    %339 = vmatpush1.bf16.msra.mxu0 0
    %340 = vmatprep.subr.bf16.mxu0 0
    %341 = vmatpush1.bf16.msra.mxu0 0
    %342 = vmatprep.subr.bf16.mxu0 0
    %343 = vmatpush1.bf16.msra.mxu0 0
    %344 = vmatprep.subr.bf16.mxu0 0
    %345 = vmatpush1.bf16.msra.mxu0 0
    %346 = vmatprep.subr.bf16.mxu0 0
    %347 = vmatpush1.bf16.msra.mxu0 %v330
    %348 = vmatprep.subr.bf16.mxu0 0
    %349 = vmatpush2.bf16.msra.mxu0 0
    %350 = vmatprep.subr.bf16.mxu0 0
    %351 = vmatpush2.bf16.msra.mxu0 0
    %352 = vmatprep.subr.bf16.mxu0 0
    %353 = vmatpush2.bf16.msra.mxu0 0
    %354 = vmatprep.subr.bf16.mxu0 0
    %355 = vmatpush2.bf16.msra.mxu0 0
    %356 = vmatprep.subr.bf16.mxu0 0
    %357 = vmatpush2.bf16.msra.mxu0 0
    %358 = vmatprep.subr.bf16.mxu0 0
    %359 = vmatpush2.bf16.msra.mxu0 0
    %360 = vmatprep.subr.bf16.mxu0 0
    %361 = vmatpush2.bf16.msra.mxu0 0
    %362 = vmatprep.subr.bf16.mxu0 0
    %363 = vmatpush2.bf16.msra.mxu0 0
    %364 = vmatprep.mubr.bf16.mxu0 0
    %365 = vmatmul.mubr.bf16.gmra.mxu0 %v327
    %v366 = vpop.f32.mrf.mxu0
    %v367 = vadd.f32 0.0, %v366
    %v368 = vpop.f32.mrf.mxu0
    %v369 = vpop.f32.mrf.mxu0
    %v370 = vpop.f32.mrf.mxu0
    %371 = vdwg.mxu0
    %372 = vst.msk [vmem:[#allocation2] sm:$0xff] %vm152, %v319
    %373 = vst.msk [vmem:[#allocation2 + $0x8] sm:$0xff] %vm152, %v367
    %374 = vrot.lane.b32.xlu0 %v143, 120
    %v375 = vpop.permute.xlu0 %374
    %376 = vrot.lane.b32.xlu0 %v143, 88
    %v377 = vpop.permute.xlu0 %376
    %v379 = vsel %vm152, %v375, 0
    %v382 = vsel %vm152, %v377, 0
    %384 = vmatprep.subr.bf16.mxu0 0
    %385 = vmatpush1.bf16.xpose.msra.mxu0 0
    %386 = vmatprep.subr.bf16.mxu0 0
    %387 = vmatpush1.bf16.xpose.msra.mxu0 0
    %388 = vmatprep.subr.bf16.mxu0 0
    %389 = vmatpush1.bf16.xpose.msra.mxu0 0
    %390 = vmatprep.subr.bf16.mxu0 0
    %391 = vmatpush1.bf16.xpose.msra.mxu0 0
    %392 = vmatprep.subr.bf16.mxu0 0
    %393 = vmatpush1.bf16.xpose.msra.mxu0 0
    %394 = vmatprep.subr.bf16.mxu0 0
    %395 = vmatpush1.bf16.xpose.msra.mxu0 0
    %396 = vmatprep.subr.bf16.mxu0 0
    %397 = vmatpush1.bf16.xpose.msra.mxu0 0
    %398 = vmatprep.subr.bf16.mxu0 0
    %399 = vmatpush1.bf16.xpose.msra.mxu0 %v382
    %400 = vmatprep.subr.bf16.mxu0 0
    %401 = vmatpush2.bf16.xpose.msra.mxu0 0
    %402 = vmatprep.subr.bf16.mxu0 0
    %403 = vmatpush2.bf16.xpose.msra.mxu0 0
    %404 = vmatprep.subr.bf16.mxu0 0
    %405 = vmatpush2.bf16.xpose.msra.mxu0 0
    %406 = vmatprep.subr.bf16.mxu0 0
    %407 = vmatpush2.bf16.xpose.msra.mxu0 0
    %408 = vmatprep.subr.bf16.mxu0 0
    %409 = vmatpush2.bf16.xpose.msra.mxu0 0
    %410 = vmatprep.subr.bf16.mxu0 0
    %411 = vmatpush2.bf16.xpose.msra.mxu0 0
    %412 = vmatprep.subr.bf16.mxu0 0
    %413 = vmatpush2.bf16.xpose.msra.mxu0 0
    %414 = vmatprep.subr.bf16.mxu0 0
    %415 = vmatpush2.bf16.xpose.msra.mxu0 0
    %416 = vmatprep.mubr.bf16.mxu0 0
    %417 = vmatmul.mubr.bf16.gmra.mxu0 %v379
    %v418 = vpop.f32.mrf.mxu0
    %v419 = vadd.f32 0.0, %v418
    %v420 = vpop.f32.mrf.mxu0
    %v421 = vpop.f32.mrf.mxu0
    %v422 = vpop.f32.mrf.mxu0
    %423 = vdwg.mxu0
    %424 = vrot.lane.b32.xlu0 %v144, 120
    %v425 = vpop.permute.xlu0 %424
    %426 = vrot.lane.b32.xlu0 %v144, 88
    %v427 = vpop.permute.xlu0 %426
    %v429 = vsel %vm152, %v425, 0
    %v432 = vsel %vm152, %v427, 0
    %434 = vmatprep.subr.bf16.mxu0 0
    %435 = vmatpush1.bf16.xpose.msra.mxu0 0
    %436 = vmatprep.subr.bf16.mxu0 0
    %437 = vmatpush1.bf16.xpose.msra.mxu0 0
    %438 = vmatprep.subr.bf16.mxu0 0
    %439 = vmatpush1.bf16.xpose.msra.mxu0 0
    %440 = vmatprep.subr.bf16.mxu0 0
    %441 = vmatpush1.bf16.xpose.msra.mxu0 0
    %442 = vmatprep.subr.bf16.mxu0 0
    %443 = vmatpush1.bf16.xpose.msra.mxu0 0
    %444 = vmatprep.subr.bf16.mxu0 0
    %445 = vmatpush1.bf16.xpose.msra.mxu0 0
    %446 = vmatprep.subr.bf16.mxu0 0
    %447 = vmatpush1.bf16.xpose.msra.mxu0 0
    %448 = vmatprep.subr.bf16.mxu0 0
    %449 = vmatpush1.bf16.xpose.msra.mxu0 %v432
    %450 = vmatprep.subr.bf16.mxu0 0
    %451 = vmatpush2.bf16.xpose.msra.mxu0 0
    %452 = vmatprep.subr.bf16.mxu0 0
    %453 = vmatpush2.bf16.xpose.msra.mxu0 0
    %454 = vmatprep.subr.bf16.mxu0 0
    %455 = vmatpush2.bf16.xpose.msra.mxu0 0
    %456 = vmatprep.subr.bf16.mxu0 0
    %457 = vmatpush2.bf16.xpose.msra.mxu0 0
    %458 = vmatprep.subr.bf16.mxu0 0
    %459 = vmatpush2.bf16.xpose.msra.mxu0 0
    %460 = vmatprep.subr.bf16.mxu0 0
    %461 = vmatpush2.bf16.xpose.msra.mxu0 0
    %462 = vmatprep.subr.bf16.mxu0 0
    %463 = vmatpush2.bf16.xpose.msra.mxu0 0
    %464 = vmatprep.subr.bf16.mxu0 0
    %465 = vmatpush2.bf16.xpose.msra.mxu0 0
    %466 = vmatprep.mubr.bf16.mxu0 0
    %467 = vmatmul.mubr.bf16.gmra.mxu0 %v429
    %v468 = vpop.f32.mrf.mxu0
    %v469 = vadd.f32 0.0, %v468
    %v470 = vpop.f32.mrf.mxu0
    %v471 = vpop.f32.mrf.mxu0
    %v472 = vpop.f32.mrf.mxu0
    %473 = vdwg.mxu0
    %v474 = vsel %vm248, %v419, -1e+30
    %v475 = vsel %vm248, %v469, -1e+30
    %v476 = vsel %vm152, %v474, -inf
    %477 = vmax.xlane.f32.xlu0 %v476
    %v478 = vpop.xlane.xlu0 %477
    %v479 = vsel %vm152, %v475, -inf
    %480 = vmax.xlane.f32.xlu0 %v479
    %v481 = vpop.xlane.xlu0 %480
    %v482 = vsub.f32 %v474, %v478
    %v483 = vsub.f32 %v475, %v481
    %v484 = vmul.f32 %v482, 1.442695
    %v485 = vpow.pop %v484
    %v486 = vmul.f32 %v483, 1.442695
    %v487 = vpow.pop %v486
    %v488 = vsel %vm152, %v485, 0.0
    %489 = vadd.xlane.f32.xlu0 %v488
    %v490 = vpop.xlane.xlu0 %489
    %v491 = vsel %vm152, %v487, 0.0
    %492 = vadd.xlane.f32.xlu0 %v491
    %v493 = vpop.xlane.xlu0 %492
    %v494 = vrcp.pop %v490
    %v495 = vrcp.pop %v493
    %v496 = vmul.f32 %v485, %v494
    %v497 = vmul.f32 %v487, %v495
    %v498 = vpack.c.bf16 %v496, %v496
    %v499 = vpack.c.bf16 %v497, %v497
    %500 = vrot.lane.b32.xlu0 %v143, 56
    %v501 = vpop.permute.xlu0 %500
    %v503 = vsel %vm152, %v498, 0
    %v506 = vsel %vm280, %v501, 0
    %508 = vmatprep.subr.bf16.mxu0 0
    %509 = vmatpush1.bf16.msra.mxu0 0
    %510 = vmatprep.subr.bf16.mxu0 0
    %511 = vmatpush1.bf16.msra.mxu0 0
    %512 = vmatprep.subr.bf16.mxu0 0
    %513 = vmatpush1.bf16.msra.mxu0 0
    %514 = vmatprep.subr.bf16.mxu0 0
    %515 = vmatpush1.bf16.msra.mxu0 0
    %516 = vmatprep.subr.bf16.mxu0 0
    %517 = vmatpush1.bf16.msra.mxu0 0
    %518 = vmatprep.subr.bf16.mxu0 0
    %519 = vmatpush1.bf16.msra.mxu0 0
    %520 = vmatprep.subr.bf16.mxu0 0
    %521 = vmatpush1.bf16.msra.mxu0 0
    %522 = vmatprep.subr.bf16.mxu0 0
    %523 = vmatpush1.bf16.msra.mxu0 %v506
    %524 = vmatprep.subr.bf16.mxu0 0
    %525 = vmatpush2.bf16.msra.mxu0 0
    %526 = vmatprep.subr.bf16.mxu0 0
    %527 = vmatpush2.bf16.msra.mxu0 0
    %528 = vmatprep.subr.bf16.mxu0 0
    %529 = vmatpush2.bf16.msra.mxu0 0
    %530 = vmatprep.subr.bf16.mxu0 0
    %531 = vmatpush2.bf16.msra.mxu0 0
    %532 = vmatprep.subr.bf16.mxu0 0
    %533 = vmatpush2.bf16.msra.mxu0 0
    %534 = vmatprep.subr.bf16.mxu0 0
    %535 = vmatpush2.bf16.msra.mxu0 0
    %536 = vmatprep.subr.bf16.mxu0 0
    %537 = vmatpush2.bf16.msra.mxu0 0
    %538 = vmatprep.subr.bf16.mxu0 0
    %539 = vmatpush2.bf16.msra.mxu0 0
    %540 = vmatprep.mubr.bf16.mxu0 0
    %541 = vmatmul.mubr.bf16.gmra.mxu0 %v503
    %v542 = vpop.f32.mrf.mxu0
    %v543 = vadd.f32 0.0, %v542
    %v544 = vpop.f32.mrf.mxu0
    %v545 = vpop.f32.mrf.mxu0
    %v546 = vpop.f32.mrf.mxu0
    %547 = vdwg.mxu0
    %548 = vrot.lane.b32.xlu0 %v144, 56
    %v549 = vpop.permute.xlu0 %548
    %v551 = vsel %vm152, %v499, 0
    %v554 = vsel %vm280, %v549, 0
    %556 = vmatprep.subr.bf16.mxu0 0
    %557 = vmatpush1.bf16.msra.mxu0 0
    %558 = vmatprep.subr.bf16.mxu0 0
    %559 = vmatpush1.bf16.msra.mxu0 0
    %560 = vmatprep.subr.bf16.mxu0 0
    %561 = vmatpush1.bf16.msra.mxu0 0
    %562 = vmatprep.subr.bf16.mxu0 0
    %563 = vmatpush1.bf16.msra.mxu0 0
    %564 = vmatprep.subr.bf16.mxu0 0
    %565 = vmatpush1.bf16.msra.mxu0 0
    %566 = vmatprep.subr.bf16.mxu0 0
    %567 = vmatpush1.bf16.msra.mxu0 0
    %568 = vmatprep.subr.bf16.mxu0 0
    %569 = vmatpush1.bf16.msra.mxu0 0
    %570 = vmatprep.subr.bf16.mxu0 0
    %571 = vmatpush1.bf16.msra.mxu0 %v554
    %572 = vmatprep.subr.bf16.mxu0 0
    %573 = vmatpush2.bf16.msra.mxu0 0
    %574 = vmatprep.subr.bf16.mxu0 0
    %575 = vmatpush2.bf16.msra.mxu0 0
    %576 = vmatprep.subr.bf16.mxu0 0
    %577 = vmatpush2.bf16.msra.mxu0 0
    %578 = vmatprep.subr.bf16.mxu0 0
    %579 = vmatpush2.bf16.msra.mxu0 0
    %580 = vmatprep.subr.bf16.mxu0 0
    %581 = vmatpush2.bf16.msra.mxu0 0
    %582 = vmatprep.subr.bf16.mxu0 0
    %583 = vmatpush2.bf16.msra.mxu0 0
    %584 = vmatprep.subr.bf16.mxu0 0
    %585 = vmatpush2.bf16.msra.mxu0 0
    %586 = vmatprep.subr.bf16.mxu0 0
    %587 = vmatpush2.bf16.msra.mxu0 0
    %588 = vmatprep.mubr.bf16.mxu0 0
    %589 = vmatmul.mubr.bf16.gmra.mxu0 %v551
    %v590 = vpop.f32.mrf.mxu0
    %v591 = vadd.f32 0.0, %v590
    %v592 = vpop.f32.mrf.mxu0
    %v593 = vpop.f32.mrf.mxu0
    %v594 = vpop.f32.mrf.mxu0
    %595 = vdwg.mxu0
    %598 = vrot.lane.b32.xlu0 %v543, 8
    %v599 = vpop.permute.xlu0 %598
    %600 = vrot.lane.b32.xlu0 %v591, 8
    %v601 = vpop.permute.xlu0 %600
    %vm604 = vcmask 130112
    %605 = vst.msk [vmem:[#allocation2] sm:$0xff] %vm604, %v599
    %606 = vst.msk [vmem:[#allocation2 + $0x8] sm:$0xff] %vm604, %v601
    %607 = vrot.lane.b32.xlu0 %v143, 112
    %v608 = vpop.permute.xlu0 %607
    %609 = vrot.lane.b32.xlu0 %v143, 80
    %v610 = vpop.permute.xlu0 %609
    %v612 = vsel %vm152, %v608, 0
    %v615 = vsel %vm152, %v610, 0
    %617 = vmatprep.subr.bf16.mxu0 0
    %618 = vmatpush1.bf16.xpose.msra.mxu0 0
    %619 = vmatprep.subr.bf16.mxu0 0
    %620 = vmatpush1.bf16.xpose.msra.mxu0 0
    %621 = vmatprep.subr.bf16.mxu0 0
    %622 = vmatpush1.bf16.xpose.msra.mxu0 0
    %623 = vmatprep.subr.bf16.mxu0 0
    %624 = vmatpush1.bf16.xpose.msra.mxu0 0
    %625 = vmatprep.subr.bf16.mxu0 0
    %626 = vmatpush1.bf16.xpose.msra.mxu0 0
    %627 = vmatprep.subr.bf16.mxu0 0
    %628 = vmatpush1.bf16.xpose.msra.mxu0 0
    %629 = vmatprep.subr.bf16.mxu0 0
    %630 = vmatpush1.bf16.xpose.msra.mxu0 0
    %631 = vmatprep.subr.bf16.mxu0 0
    %632 = vmatpush1.bf16.xpose.msra.mxu0 %v615
    %633 = vmatprep.subr.bf16.mxu0 0
    %634 = vmatpush2.bf16.xpose.msra.mxu0 0
    %635 = vmatprep.subr.bf16.mxu0 0
    %636 = vmatpush2.bf16.xpose.msra.mxu0 0
    %637 = vmatprep.subr.bf16.mxu0 0
    %638 = vmatpush2.bf16.xpose.msra.mxu0 0
    %639 = vmatprep.subr.bf16.mxu0 0
    %640 = vmatpush2.bf16.xpose.msra.mxu0 0
    %641 = vmatprep.subr.bf16.mxu0 0
    %642 = vmatpush2.bf16.xpose.msra.mxu0 0
    %643 = vmatprep.subr.bf16.mxu0 0
    %644 = vmatpush2.bf16.xpose.msra.mxu0 0
    %645 = vmatprep.subr.bf16.mxu0 0
    %646 = vmatpush2.bf16.xpose.msra.mxu0 0
    %647 = vmatprep.subr.bf16.mxu0 0
    %648 = vmatpush2.bf16.xpose.msra.mxu0 0
    %649 = vmatprep.mubr.bf16.mxu0 0
    %650 = vmatmul.mubr.bf16.gmra.mxu0 %v612
    %v651 = vpop.f32.mrf.mxu0
    %v652 = vadd.f32 0.0, %v651
    %v653 = vpop.f32.mrf.mxu0
    %v654 = vpop.f32.mrf.mxu0
    %v655 = vpop.f32.mrf.mxu0
    %656 = vdwg.mxu0
    %657 = vrot.lane.b32.xlu0 %v144, 112
    %v658 = vpop.permute.xlu0 %657
    %659 = vrot.lane.b32.xlu0 %v144, 80
    %v660 = vpop.permute.xlu0 %659
    %v662 = vsel %vm152, %v658, 0
    %v665 = vsel %vm152, %v660, 0
    %667 = vmatprep.subr.bf16.mxu0 0
    %668 = vmatpush1.bf16.xpose.msra.mxu0 0
    %669 = vmatprep.subr.bf16.mxu0 0
    %670 = vmatpush1.bf16.xpose.msra.mxu0 0
    %671 = vmatprep.subr.bf16.mxu0 0
    %672 = vmatpush1.bf16.xpose.msra.mxu0 0
    %673 = vmatprep.subr.bf16.mxu0 0
    %674 = vmatpush1.bf16.xpose.msra.mxu0 0
    %675 = vmatprep.subr.bf16.mxu0 0
    %676 = vmatpush1.bf16.xpose.msra.mxu0 0
    %677 = vmatprep.subr.bf16.mxu0 0
    %678 = vmatpush1.bf16.xpose.msra.mxu0 0
    %679 = vmatprep.subr.bf16.mxu0 0
    %680 = vmatpush1.bf16.xpose.msra.mxu0 0
    %681 = vmatprep.subr.bf16.mxu0 0
    %682 = vmatpush1.bf16.xpose.msra.mxu0 %v665
    %683 = vmatprep.subr.bf16.mxu0 0
    %684 = vmatpush2.bf16.xpose.msra.mxu0 0
    %685 = vmatprep.subr.bf16.mxu0 0
    %686 = vmatpush2.bf16.xpose.msra.mxu0 0
    %687 = vmatprep.subr.bf16.mxu0 0
    %688 = vmatpush2.bf16.xpose.msra.mxu0 0
    %689 = vmatprep.subr.bf16.mxu0 0
    %690 = vmatpush2.bf16.xpose.msra.mxu0 0
    %691 = vmatprep.subr.bf16.mxu0 0
    %692 = vmatpush2.bf16.xpose.msra.mxu0 0
    %693 = vmatprep.subr.bf16.mxu0 0
    %694 = vmatpush2.bf16.xpose.msra.mxu0 0
    %695 = vmatprep.subr.bf16.mxu0 0
    %696 = vmatpush2.bf16.xpose.msra.mxu0 0
    %697 = vmatprep.subr.bf16.mxu0 0
    %698 = vmatpush2.bf16.xpose.msra.mxu0 0
    %699 = vmatprep.mubr.bf16.mxu0 0
    %700 = vmatmul.mubr.bf16.gmra.mxu0 %v662
    %v701 = vpop.f32.mrf.mxu0
    %v702 = vadd.f32 0.0, %v701
    %v703 = vpop.f32.mrf.mxu0
    %v704 = vpop.f32.mrf.mxu0
    %v705 = vpop.f32.mrf.mxu0
    %706 = vdwg.mxu0
    %v707 = vsel %vm248, %v652, -1e+30
    %v708 = vsel %vm248, %v702, -1e+30
    %v709 = vsel %vm152, %v707, -inf
    %710 = vmax.xlane.f32.xlu0 %v709
    %v711 = vpop.xlane.xlu0 %710
    %v712 = vsel %vm152, %v708, -inf
    %713 = vmax.xlane.f32.xlu0 %v712
    %v714 = vpop.xlane.xlu0 %713
    %v715 = vsub.f32 %v707, %v711
    %v716 = vsub.f32 %v708, %v714
    %v717 = vmul.f32 %v715, 1.442695
    %v718 = vpow.pop %v717
    %v719 = vmul.f32 %v716, 1.442695
    %v720 = vpow.pop %v719
    %v721 = vsel %vm152, %v718, 0.0
    %722 = vadd.xlane.f32.xlu0 %v721
    %v723 = vpop.xlane.xlu0 %722
    %v724 = vsel %vm152, %v720, 0.0
    %725 = vadd.xlane.f32.xlu0 %v724
    %v726 = vpop.xlane.xlu0 %725
    %v727 = vrcp.pop %v723
    %v728 = vrcp.pop %v726
    %v729 = vmul.f32 %v718, %v727
    %v730 = vmul.f32 %v720, %v728
    %v731 = vpack.c.bf16 %v729, %v729
    %v732 = vpack.c.bf16 %v730, %v730
    %733 = vrot.lane.b32.xlu0 %v143, 48
    %v734 = vpop.permute.xlu0 %733
    %v736 = vsel %vm152, %v731, 0
    %v739 = vsel %vm280, %v734, 0
    %741 = vmatprep.subr.bf16.mxu0 0
    %742 = vmatpush1.bf16.msra.mxu0 0
    %743 = vmatprep.subr.bf16.mxu0 0
    %744 = vmatpush1.bf16.msra.mxu0 0
    %745 = vmatprep.subr.bf16.mxu0 0
    %746 = vmatpush1.bf16.msra.mxu0 0
    %747 = vmatprep.subr.bf16.mxu0 0
    %748 = vmatpush1.bf16.msra.mxu0 0
    %749 = vmatprep.subr.bf16.mxu0 0
    %750 = vmatpush1.bf16.msra.mxu0 0
    %751 = vmatprep.subr.bf16.mxu0 0
    %752 = vmatpush1.bf16.msra.mxu0 0
    %753 = vmatprep.subr.bf16.mxu0 0
    %754 = vmatpush1.bf16.msra.mxu0 0
    %755 = vmatprep.subr.bf16.mxu0 0
    %756 = vmatpush1.bf16.msra.mxu0 %v739
    %757 = vmatprep.subr.bf16.mxu0 0
    %758 = vmatpush2.bf16.msra.mxu0 0
    %759 = vmatprep.subr.bf16.mxu0 0
    %760 = vmatpush2.bf16.msra.mxu0 0
    %761 = vmatprep.subr.bf16.mxu0 0
    %762 = vmatpush2.bf16.msra.mxu0 0
    %763 = vmatprep.subr.bf16.mxu0 0
    %764 = vmatpush2.bf16.msra.mxu0 0
    %765 = vmatprep.subr.bf16.mxu0 0
    %766 = vmatpush2.bf16.msra.mxu0 0
    %767 = vmatprep.subr.bf16.mxu0 0
    %768 = vmatpush2.bf16.msra.mxu0 0
    %769 = vmatprep.subr.bf16.mxu0 0
    %770 = vmatpush2.bf16.msra.mxu0 0
    %771 = vmatprep.subr.bf16.mxu0 0
    %772 = vmatpush2.bf16.msra.mxu0 0
    %773 = vmatprep.mubr.bf16.mxu0 0
    %774 = vmatmul.mubr.bf16.gmra.mxu0 %v736
    %v775 = vpop.f32.mrf.mxu0
    %v776 = vadd.f32 0.0, %v775
    %v777 = vpop.f32.mrf.mxu0
    %v778 = vpop.f32.mrf.mxu0
    %v779 = vpop.f32.mrf.mxu0
    %780 = vdwg.mxu0
    %781 = vrot.lane.b32.xlu0 %v144, 48
    %v782 = vpop.permute.xlu0 %781
    %v784 = vsel %vm152, %v732, 0
    %v787 = vsel %vm280, %v782, 0
    %789 = vmatprep.subr.bf16.mxu0 0
    %790 = vmatpush1.bf16.msra.mxu0 0
    %791 = vmatprep.subr.bf16.mxu0 0
    %792 = vmatpush1.bf16.msra.mxu0 0
    %793 = vmatprep.subr.bf16.mxu0 0
    %794 = vmatpush1.bf16.msra.mxu0 0
    %795 = vmatprep.subr.bf16.mxu0 0
    %796 = vmatpush1.bf16.msra.mxu0 0
    %797 = vmatprep.subr.bf16.mxu0 0
    %798 = vmatpush1.bf16.msra.mxu0 0
    %799 = vmatprep.subr.bf16.mxu0 0
    %800 = vmatpush1.bf16.msra.mxu0 0
    %801 = vmatprep.subr.bf16.mxu0 0
    %802 = vmatpush1.bf16.msra.mxu0 0
    %803 = vmatprep.subr.bf16.mxu0 0
    %804 = vmatpush1.bf16.msra.mxu0 %v787
    %805 = vmatprep.subr.bf16.mxu0 0
    %806 = vmatpush2.bf16.msra.mxu0 0
    %807 = vmatprep.subr.bf16.mxu0 0
    %808 = vmatpush2.bf16.msra.mxu0 0
    %809 = vmatprep.subr.bf16.mxu0 0
    %810 = vmatpush2.bf16.msra.mxu0 0
    %811 = vmatprep.subr.bf16.mxu0 0
    %812 = vmatpush2.bf16.msra.mxu0 0
    %813 = vmatprep.subr.bf16.mxu0 0
    %814 = vmatpush2.bf16.msra.mxu0 0
    %815 = vmatprep.subr.bf16.mxu0 0
    %816 = vmatpush2.bf16.msra.mxu0 0
    %817 = vmatprep.subr.bf16.mxu0 0
    %818 = vmatpush2.bf16.msra.mxu0 0
    %819 = vmatprep.subr.bf16.mxu0 0
    %820 = vmatpush2.bf16.msra.mxu0 0
    %821 = vmatprep.mubr.bf16.mxu0 0
    %822 = vmatmul.mubr.bf16.gmra.mxu0 %v784
    %v823 = vpop.f32.mrf.mxu0
    %v824 = vadd.f32 0.0, %v823
    %v825 = vpop.f32.mrf.mxu0
    %v826 = vpop.f32.mrf.mxu0
    %v827 = vpop.f32.mrf.mxu0
    %828 = vdwg.mxu0
    %831 = vrot.lane.b32.xlu0 %v776, 16
    %v832 = vpop.permute.xlu0 %831
    %833 = vrot.lane.b32.xlu0 %v824, 16
    %v834 = vpop.permute.xlu0 %833
    %vm837 = vcmask 195712
    %838 = vst.msk [vmem:[#allocation2] sm:$0xff] %vm837, %v832
    %839 = vst.msk [vmem:[#allocation2 + $0x8] sm:$0xff] %vm837, %v834
    %840 = vrot.lane.b32.xlu0 %v143, 104
    %v841 = vpop.permute.xlu0 %840
    %842 = vrot.lane.b32.xlu0 %v143, 72
    %v843 = vpop.permute.xlu0 %842
    %v845 = vsel %vm152, %v841, 0
    %v848 = vsel %vm152, %v843, 0
    %850 = vmatprep.subr.bf16.mxu0 0
    %851 = vmatpush1.bf16.xpose.msra.mxu0 0
    %852 = vmatprep.subr.bf16.mxu0 0
    %853 = vmatpush1.bf16.xpose.msra.mxu0 0
    %854 = vmatprep.subr.bf16.mxu0 0
    %855 = vmatpush1.bf16.xpose.msra.mxu0 0
    %856 = vmatprep.subr.bf16.mxu0 0
    %857 = vmatpush1.bf16.xpose.msra.mxu0 0
    %858 = vmatprep.subr.bf16.mxu0 0
    %859 = vmatpush1.bf16.xpose.msra.mxu0 0
    %860 = vmatprep.subr.bf16.mxu0 0
    %861 = vmatpush1.bf16.xpose.msra.mxu0 0
    %862 = vmatprep.subr.bf16.mxu0 0
    %863 = vmatpush1.bf16.xpose.msra.mxu0 0
    %864 = vmatprep.subr.bf16.mxu0 0
    %865 = vmatpush1.bf16.xpose.msra.mxu0 %v848
    %866 = vmatprep.subr.bf16.mxu0 0
    %867 = vmatpush2.bf16.xpose.msra.mxu0 0
    %868 = vmatprep.subr.bf16.mxu0 0
    %869 = vmatpush2.bf16.xpose.msra.mxu0 0
    %870 = vmatprep.subr.bf16.mxu0 0
    %871 = vmatpush2.bf16.xpose.msra.mxu0 0
    %872 = vmatprep.subr.bf16.mxu0 0
    %873 = vmatpush2.bf16.xpose.msra.mxu0 0
    %874 = vmatprep.subr.bf16.mxu0 0
    %875 = vmatpush2.bf16.xpose.msra.mxu0 0
    %876 = vmatprep.subr.bf16.mxu0 0
    %877 = vmatpush2.bf16.xpose.msra.mxu0 0
    %878 = vmatprep.subr.bf16.mxu0 0
    %879 = vmatpush2.bf16.xpose.msra.mxu0 0
    %880 = vmatprep.subr.bf16.mxu0 0
    %881 = vmatpush2.bf16.xpose.msra.mxu0 0
    %882 = vmatprep.mubr.bf16.mxu0 0
    %883 = vmatmul.mubr.bf16.gmra.mxu0 %v845
    %v884 = vpop.f32.mrf.mxu0
    %v885 = vadd.f32 0.0, %v884
    %v886 = vpop.f32.mrf.mxu0
    %v887 = vpop.f32.mrf.mxu0
    %v888 = vpop.f32.mrf.mxu0
    %889 = vdwg.mxu0
    %890 = vrot.lane.b32.xlu0 %v144, 104
    %v891 = vpop.permute.xlu0 %890
    %892 = vrot.lane.b32.xlu0 %v144, 72
    %v893 = vpop.permute.xlu0 %892
    %v895 = vsel %vm152, %v891, 0
    %v898 = vsel %vm152, %v893, 0
    %900 = vmatprep.subr.bf16.mxu0 0
    %901 = vmatpush1.bf16.xpose.msra.mxu0 0
    %902 = vmatprep.subr.bf16.mxu0 0
    %903 = vmatpush1.bf16.xpose.msra.mxu0 0
    %904 = vmatprep.subr.bf16.mxu0 0
    %905 = vmatpush1.bf16.xpose.msra.mxu0 0
    %906 = vmatprep.subr.bf16.mxu0 0
    %907 = vmatpush1.bf16.xpose.msra.mxu0 0
    %908 = vmatprep.subr.bf16.mxu0 0
    %909 = vmatpush1.bf16.xpose.msra.mxu0 0
    %910 = vmatprep.subr.bf16.mxu0 0
    %911 = vmatpush1.bf16.xpose.msra.mxu0 0
    %912 = vmatprep.subr.bf16.mxu0 0
    %913 = vmatpush1.bf16.xpose.msra.mxu0 0
    %914 = vmatprep.subr.bf16.mxu0 0
    %915 = vmatpush1.bf16.xpose.msra.mxu0 %v898
    %916 = vmatprep.subr.bf16.mxu0 0
    %917 = vmatpush2.bf16.xpose.msra.mxu0 0
    %918 = vmatprep.subr.bf16.mxu0 0
    %919 = vmatpush2.bf16.xpose.msra.mxu0 0
    %920 = vmatprep.subr.bf16.mxu0 0
    %921 = vmatpush2.bf16.xpose.msra.mxu0 0
    %922 = vmatprep.subr.bf16.mxu0 0
    %923 = vmatpush2.bf16.xpose.msra.mxu0 0
    %924 = vmatprep.subr.bf16.mxu0 0
    %925 = vmatpush2.bf16.xpose.msra.mxu0 0
    %926 = vmatprep.subr.bf16.mxu0 0
    %927 = vmatpush2.bf16.xpose.msra.mxu0 0
    %928 = vmatprep.subr.bf16.mxu0 0
    %929 = vmatpush2.bf16.xpose.msra.mxu0 0
    %930 = vmatprep.subr.bf16.mxu0 0
    %931 = vmatpush2.bf16.xpose.msra.mxu0 0
    %932 = vmatprep.mubr.bf16.mxu0 0
    %933 = vmatmul.mubr.bf16.gmra.mxu0 %v895
    %v934 = vpop.f32.mrf.mxu0
    %v935 = vadd.f32 0.0, %v934
    %v936 = vpop.f32.mrf.mxu0
    %v937 = vpop.f32.mrf.mxu0
    %v938 = vpop.f32.mrf.mxu0
    %939 = vdwg.mxu0
    %v940 = vsel %vm248, %v885, -1e+30
    %v941 = vsel %vm248, %v935, -1e+30
    %v942 = vsel %vm152, %v940, -inf
    %943 = vmax.xlane.f32.xlu0 %v942
    %v944 = vpop.xlane.xlu0 %943
    %v945 = vsel %vm152, %v941, -inf
    %946 = vmax.xlane.f32.xlu0 %v945
    %v947 = vpop.xlane.xlu0 %946
    %v948 = vsub.f32 %v940, %v944
    %v949 = vsub.f32 %v941, %v947
    %v950 = vmul.f32 %v948, 1.442695
    %v951 = vpow.pop %v950
    %v952 = vmul.f32 %v949, 1.442695
    %v953 = vpow.pop %v952
    %v954 = vsel %vm152, %v951, 0.0
    %955 = vadd.xlane.f32.xlu0 %v954
    %v956 = vpop.xlane.xlu0 %955
    %v957 = vsel %vm152, %v953, 0.0
    %958 = vadd.xlane.f32.xlu0 %v957
    %v959 = vpop.xlane.xlu0 %958
    %v960 = vrcp.pop %v956
    %v961 = vrcp.pop %v959
    %v962 = vmul.f32 %v951, %v960
    %v963 = vmul.f32 %v953, %v961
    %v964 = vpack.c.bf16 %v962, %v962
    %v965 = vpack.c.bf16 %v963, %v963
    %966 = vrot.lane.b32.xlu0 %v143, 40
    %v967 = vpop.permute.xlu0 %966
    %v969 = vsel %vm152, %v964, 0
    %v972 = vsel %vm280, %v967, 0
    %974 = vmatprep.subr.bf16.mxu0 0
    %975 = vmatpush1.bf16.msra.mxu0 0
    %976 = vmatprep.subr.bf16.mxu0 0
    %977 = vmatpush1.bf16.msra.mxu0 0
    %978 = vmatprep.subr.bf16.mxu0 0
    %979 = vmatpush1.bf16.msra.mxu0 0
    %980 = vmatprep.subr.bf16.mxu0 0
    %981 = vmatpush1.bf16.msra.mxu0 0
    %982 = vmatprep.subr.bf16.mxu0 0
    %983 = vmatpush1.bf16.msra.mxu0 0
    %984 = vmatprep.subr.bf16.mxu0 0
    %985 = vmatpush1.bf16.msra.mxu0 0
    %986 = vmatprep.subr.bf16.mxu0 0
    %987 = vmatpush1.bf16.msra.mxu0 0
    %988 = vmatprep.subr.bf16.mxu0 0
    %989 = vmatpush1.bf16.msra.mxu0 %v972
    %990 = vmatprep.subr.bf16.mxu0 0
    %991 = vmatpush2.bf16.msra.mxu0 0
    %992 = vmatprep.subr.bf16.mxu0 0
    %993 = vmatpush2.bf16.msra.mxu0 0
    %994 = vmatprep.subr.bf16.mxu0 0
    %995 = vmatpush2.bf16.msra.mxu0 0
    %996 = vmatprep.subr.bf16.mxu0 0
    %997 = vmatpush2.bf16.msra.mxu0 0
    %998 = vmatprep.subr.bf16.mxu0 0
    %999 = vmatpush2.bf16.msra.mxu0 0
    %1000 = vmatprep.subr.bf16.mxu0 0
    %1001 = vmatpush2.bf16.msra.mxu0 0
    %1002 = vmatprep.subr.bf16.mxu0 0
    %1003 = vmatpush2.bf16.msra.mxu0 0
    %1004 = vmatprep.subr.bf16.mxu0 0
    %1005 = vmatpush2.bf16.msra.mxu0 0
    %1006 = vmatprep.mubr.bf16.mxu0 0
    %1007 = vmatmul.mubr.bf16.gmra.mxu0 %v969
    %v1008 = vpop.f32.mrf.mxu0
    %v1009 = vadd.f32 0.0, %v1008
    %v1010 = vpop.f32.mrf.mxu0
    %v1011 = vpop.f32.mrf.mxu0
    %v1012 = vpop.f32.mrf.mxu0
    %1013 = vdwg.mxu0
    %1014 = vrot.lane.b32.xlu0 %v144, 40
    %v1015 = vpop.permute.xlu0 %1014
    %v1017 = vsel %vm152, %v965, 0
    %v1020 = vsel %vm280, %v1015, 0
    %1022 = vmatprep.subr.bf16.mxu0 0
    %1023 = vmatpush1.bf16.msra.mxu0 0
    %1024 = vmatprep.subr.bf16.mxu0 0
    %1025 = vmatpush1.bf16.msra.mxu0 0
    %1026 = vmatprep.subr.bf16.mxu0 0
    %1027 = vmatpush1.bf16.msra.mxu0 0
    %1028 = vmatprep.subr.bf16.mxu0 0
    %1029 = vmatpush1.bf16.msra.mxu0 0
    %1030 = vmatprep.subr.bf16.mxu0 0
    %1031 = vmatpush1.bf16.msra.mxu0 0
    %1032 = vmatprep.subr.bf16.mxu0 0
    %1033 = vmatpush1.bf16.msra.mxu0 0
    %1034 = vmatprep.subr.bf16.mxu0 0
    %1035 = vmatpush1.bf16.msra.mxu0 0
    %1036 = vmatprep.subr.bf16.mxu0 0
    %1037 = vmatpush1.bf16.msra.mxu0 %v1020
    %1038 = vmatprep.subr.bf16.mxu0 0
    %1039 = vmatpush2.bf16.msra.mxu0 0
    %1040 = vmatprep.subr.bf16.mxu0 0
    %1041 = vmatpush2.bf16.msra.mxu0 0
    %1042 = vmatprep.subr.bf16.mxu0 0
    %1043 = vmatpush2.bf16.msra.mxu0 0
    %1044 = vmatprep.subr.bf16.mxu0 0
    %1045 = vmatpush2.bf16.msra.mxu0 0
    %1046 = vmatprep.subr.bf16.mxu0 0
    %1047 = vmatpush2.bf16.msra.mxu0 0
    %1048 = vmatprep.subr.bf16.mxu0 0
    %1049 = vmatpush2.bf16.msra.mxu0 0
    %1050 = vmatprep.subr.bf16.mxu0 0
    %1051 = vmatpush2.bf16.msra.mxu0 0
    %1052 = vmatprep.subr.bf16.mxu0 0
    %1053 = vmatpush2.bf16.msra.mxu0 0
    %1054 = vmatprep.mubr.bf16.mxu0 0
    %1055 = vmatmul.mubr.bf16.gmra.mxu0 %v1017
    %v1056 = vpop.f32.mrf.mxu0
    %v1057 = vadd.f32 0.0, %v1056
    %v1058 = vpop.f32.mrf.mxu0
    %v1059 = vpop.f32.mrf.mxu0
    %v1060 = vpop.f32.mrf.mxu0
    %1061 = vdwg.mxu0
    %1064 = vrot.lane.b32.xlu0 %v1009, 24
    %v1065 = vpop.permute.xlu0 %1064
    %1066 = vrot.lane.b32.xlu0 %v1057, 24
    %v1067 = vpop.permute.xlu0 %1066
    %vm1070 = vcmask 261312
    %1071 = vst.msk [vmem:[#allocation2] sm:$0xff] %vm1070, %v1065
    %1072 = vst.msk [vmem:[#allocation2 + $0x8] sm:$0xff] %vm1070, %v1067
    %v1073 = vld [vmem:[#allocation2] sm:$0xff]
    %v1074 = vld [vmem:[#allocation2 + $0x8] sm:$0xff]
    %v1075 = vpack.c.bf16 %v1074, %v1073
    %v1076 = vld [vmem:[#allocation3] sm:$0xf]
    %v1077 = vld [vmem:[#allocation3 + $0x4] sm:$0xf]
    %v1078 = vld [vmem:[#allocation3 + $0x8] sm:$0xf]
    %v1079 = vld [vmem:[#allocation3 + $0xc] sm:$0xf]
    %v1080 = vld [vmem:[%s3] sm:$0x1]
    %v1082 = vlaneseq
    %v1083 = vshrl.u32 %v1082, 7
    %v1084 = vsub.s32 0, %v1083
    %v1085 = vrot.slane %v1080, %v1084
    %v1091 = vunpack.c.l.b16 %v1076
    %v1092 = vunpack.c.l.b16 %v1077
    %v1093 = vunpack.c.l.b16 %v1078
    %v1094 = vunpack.c.l.b16 %v1079
    %v1095 = vpack.c.b16 %v1092, %v1091
    %v1096 = vpack.c.b16 %v1094, %v1093
    %v1100 = vsel %vm94, %v1075, 0
    %1102 = vmatprep.subr.bf16.mxu0 0
    %1103 = vmatpush1.bf16.msra.mxu0 0
    %1104 = vmatprep.subr.bf16.mxu0 0
    %1105 = vmatpush1.bf16.msra.mxu0 0
    %1106 = vmatprep.subr.bf16.mxu0 0
    %1107 = vmatpush1.bf16.msra.mxu0 0
    %1108 = vmatprep.subr.bf16.mxu0 0
    %1109 = vmatpush1.bf16.msra.mxu0 0
    %1110 = vmatprep.subr.bf16.mxu0 0
    %1111 = vmatpush1.bf16.msra.mxu0 0
    %1112 = vmatprep.subr.bf16.mxu0 0
    %1113 = vmatpush1.bf16.msra.mxu0 0
    %1114 = vmatprep.subr.bf16.mxu0 0
    %1115 = vmatpush1.bf16.msra.mxu0 %v1096
    %1116 = vmatprep.subr.bf16.mxu0 0
    %1117 = vmatpush1.bf16.msra.mxu0 %v1095
    %1118 = vmatprep.subr.bf16.mxu0 0
    %1119 = vmatpush2.bf16.msra.mxu0 0
    %1120 = vmatprep.subr.bf16.mxu0 0
    %1121 = vmatpush2.bf16.msra.mxu0 0
    %1122 = vmatprep.subr.bf16.mxu0 0
    %1123 = vmatpush2.bf16.msra.mxu0 0
    %1124 = vmatprep.subr.bf16.mxu0 0
    %1125 = vmatpush2.bf16.msra.mxu0 0
    %1126 = vmatprep.subr.bf16.mxu0 0
    %1127 = vmatpush2.bf16.msra.mxu0 0
    %1128 = vmatprep.subr.bf16.mxu0 0
    %1129 = vmatpush2.bf16.msra.mxu0 0
    %1130 = vmatprep.subr.bf16.mxu0 0
    %1131 = vmatpush2.bf16.msra.mxu0 0
    %1132 = vmatprep.subr.bf16.mxu0 0
    %1133 = vmatpush2.bf16.msra.mxu0 0
    %1134 = vmatprep.mubr.bf16.mxu0 0
    %1135 = vmatmul.mubr.bf16.gmra.mxu0 %v1100
    %v1136 = vpop.f32.mrf.mxu0
    %v1137 = vadd.f32 %v1085, %v1136
    %v1138 = vpop.f32.mrf.mxu0
    %v1139 = vpop.f32.mrf.mxu0
    %v1140 = vadd.f32 %v1085, %v1139
    %v1141 = vpop.f32.mrf.mxu0
    %1142 = vdwg.mxu0
    %v1143 = vpack.c.bf16 %v1140, %v1137
    %v1144 = vld [vmem:[#allocation5] sm:$0xf]
    %v1145 = vld [vmem:[#allocation5 + $0x4] sm:$0xf]
    %v1146 = vld [vmem:[#allocation5 + $0x8] sm:$0xf]
    %v1147 = vld [vmem:[#allocation5 + $0xc] sm:$0xf]
    %v1148 = vld [vmem:[%s5] sm:$0x1]
    %v1150 = vlaneseq
    %v1151 = vshrl.u32 %v1150, 7
    %v1152 = vsub.s32 0, %v1151
    %v1153 = vrot.slane %v1148, %v1152
    %v1159 = vunpack.c.l.b16 %v1144
    %v1160 = vunpack.c.l.b16 %v1145
    %v1161 = vunpack.c.l.b16 %v1146
    %v1162 = vunpack.c.l.b16 %v1147
    %v1163 = vpack.c.b16 %v1160, %v1159
    %v1164 = vpack.c.b16 %v1162, %v1161
    %v1168 = vsel %vm94, %v1143, 0
    %1170 = vmatprep.subr.bf16.mxu0 0
    %1171 = vmatpush1.bf16.msra.mxu0 0
    %1172 = vmatprep.subr.bf16.mxu0 0
    %1173 = vmatpush1.bf16.msra.mxu0 0
    %1174 = vmatprep.subr.bf16.mxu0 0
    %1175 = vmatpush1.bf16.msra.mxu0 0
    %1176 = vmatprep.subr.bf16.mxu0 0
    %1177 = vmatpush1.bf16.msra.mxu0 0
    %1178 = vmatprep.subr.bf16.mxu0 0
    %1179 = vmatpush1.bf16.msra.mxu0 0
    %1180 = vmatprep.subr.bf16.mxu0 0
    %1181 = vmatpush1.bf16.msra.mxu0 0
    %1182 = vmatprep.subr.bf16.mxu0 0
    %1183 = vmatpush1.bf16.msra.mxu0 %v1164
    %1184 = vmatprep.subr.bf16.mxu0 0
    %1185 = vmatpush1.bf16.msra.mxu0 %v1163
    %1186 = vmatprep.subr.bf16.mxu0 0
    %1187 = vmatpush2.bf16.msra.mxu0 0
    %1188 = vmatprep.subr.bf16.mxu0 0
    %1189 = vmatpush2.bf16.msra.mxu0 0
    %1190 = vmatprep.subr.bf16.mxu0 0
    %1191 = vmatpush2.bf16.msra.mxu0 0
    %1192 = vmatprep.subr.bf16.mxu0 0
    %1193 = vmatpush2.bf16.msra.mxu0 0
    %1194 = vmatprep.subr.bf16.mxu0 0
    %1195 = vmatpush2.bf16.msra.mxu0 0
    %1196 = vmatprep.subr.bf16.mxu0 0
    %1197 = vmatpush2.bf16.msra.mxu0 0
    %1198 = vmatprep.subr.bf16.mxu0 0
    %1199 = vmatpush2.bf16.msra.mxu0 0
    %1200 = vmatprep.subr.bf16.mxu0 0
    %1201 = vmatpush2.bf16.msra.mxu0 0
    %1202 = vmatprep.mubr.bf16.mxu0 0
    %1203 = vmatmul.mubr.bf16.gmra.mxu0 %v1168
    %v1204 = vpop.f32.mrf.mxu0
    %v1205 = vadd.f32 %v1153, %v1204
    %v1206 = vpop.f32.mrf.mxu0
    %v1207 = vpop.f32.mrf.mxu0
    %v1208 = vadd.f32 %v1153, %v1207
    %v1209 = vpop.f32.mrf.mxu0
    %1210 = vdwg.mxu0
    %v1211 = vmax.f32 %v1205, 0.0
    %v1212 = vmax.f32 %v1208, 0.0
    %v1213 = vpack.c.bf16 %v1212, %v1211
    %v1214 = vld [vmem:[#allocation7] sm:$0xf]
    %v1215 = vld [vmem:[#allocation7 + $0x4] sm:$0xf]
    %v1216 = vld [vmem:[#allocation7 + $0x8] sm:$0xf]
    %v1217 = vld [vmem:[#allocation7 + $0xc] sm:$0xf]
    %v1218 = vld [vmem:[#allocation7 + $0x10] sm:$0xf]
    %v1219 = vld [vmem:[#allocation7 + $0x14] sm:$0xf]
    %v1220 = vld [vmem:[#allocation7 + $0x18] sm:$0xf]
    %v1221 = vld [vmem:[#allocation7 + $0x1c] sm:$0xf]
    %v1222 = vld [vmem:[#allocation7 + $0x20] sm:$0xf]
    %v1223 = vld [vmem:[#allocation7 + $0x24] sm:$0xf]
    %v1224 = vld [vmem:[#allocation7 + $0x28] sm:$0xf]
    %v1225 = vld [vmem:[#allocation7 + $0x2c] sm:$0xf]
    %v1226 = vld [vmem:[#allocation7 + $0x30] sm:$0xf]
    %v1227 = vld [vmem:[#allocation7 + $0x34] sm:$0xf]
    %v1228 = vld [vmem:[#allocation7 + $0x38] sm:$0xf]
    %v1229 = vld [vmem:[#allocation7 + $0x3c] sm:$0xf]
    %v1230 = vld [vmem:[%s7] sm:$0x1]
    %v1232 = vlaneseq
    %v1233 = vshrl.u32 %v1232, 7
    %v1234 = vsub.s32 0, %v1233
    %v1235 = vrot.slane %v1230, %v1234
    %v1253 = vunpack.c.l.b16 %v1214
    %v1254 = vunpack.c.l.b16 %v1215
    %v1255 = vunpack.c.l.b16 %v1216
    %v1256 = vunpack.c.l.b16 %v1217
    %v1257 = vunpack.c.l.b16 %v1218
    %v1258 = vunpack.c.l.b16 %v1219
    %v1259 = vunpack.c.l.b16 %v1220
    %v1260 = vunpack.c.l.b16 %v1221
    %v1261 = vunpack.c.l.b16 %v1222
    %v1262 = vunpack.c.l.b16 %v1223
    %v1263 = vunpack.c.l.b16 %v1224
    %v1264 = vunpack.c.l.b16 %v1225
    %v1265 = vunpack.c.l.b16 %v1226
    %v1266 = vunpack.c.l.b16 %v1227
    %v1267 = vunpack.c.l.b16 %v1228
    %v1268 = vunpack.c.l.b16 %v1229
    %v1269 = vpack.c.b16 %v1254, %v1253
    %v1270 = vpack.c.b16 %v1256, %v1255
    %v1271 = vpack.c.b16 %v1258, %v1257
    %v1272 = vpack.c.b16 %v1260, %v1259
    %v1273 = vpack.c.b16 %v1262, %v1261
    %v1274 = vpack.c.b16 %v1264, %v1263
    %v1275 = vpack.c.b16 %v1266, %v1265
    %v1276 = vpack.c.b16 %v1268, %v1267
    %1285 = vmatprep.subr.bf16.mxu0 0
    %1286 = vmatpush1.bf16.msra.mxu0 %v1276
    %1287 = vmatprep.subr.bf16.mxu0 0
    %1288 = vmatpush1.bf16.msra.mxu0 %v1275
    %1289 = vmatprep.subr.bf16.mxu0 0
    %1290 = vmatpush1.bf16.msra.mxu0 %v1274
    %1291 = vmatprep.subr.bf16.mxu0 0
    %1292 = vmatpush1.bf16.msra.mxu0 %v1273
    %1293 = vmatprep.subr.bf16.mxu0 0
    %1294 = vmatpush1.bf16.msra.mxu0 %v1272
    %1295 = vmatprep.subr.bf16.mxu0 0
    %1296 = vmatpush1.bf16.msra.mxu0 %v1271
    %1297 = vmatprep.subr.bf16.mxu0 0
    %1298 = vmatpush1.bf16.msra.mxu0 %v1270
    %1299 = vmatprep.subr.bf16.mxu0 0
    %1300 = vmatpush1.bf16.msra.mxu0 %v1269
    %1301 = vmatprep.subr.bf16.mxu0 0
    %1302 = vmatpush2.bf16.msra.mxu0 0
    %1303 = vmatprep.subr.bf16.mxu0 0
    %1304 = vmatpush2.bf16.msra.mxu0 0
    %1305 = vmatprep.subr.bf16.mxu0 0
    %1306 = vmatpush2.bf16.msra.mxu0 0
    %1307 = vmatprep.subr.bf16.mxu0 0
    %1308 = vmatpush2.bf16.msra.mxu0 0
    %1309 = vmatprep.subr.bf16.mxu0 0
    %1310 = vmatpush2.bf16.msra.mxu0 0
    %1311 = vmatprep.subr.bf16.mxu0 0
    %1312 = vmatpush2.bf16.msra.mxu0 0
    %1313 = vmatprep.subr.bf16.mxu0 0
    %1314 = vmatpush2.bf16.msra.mxu0 0
    %1315 = vmatprep.subr.bf16.mxu0 0
    %1316 = vmatpush2.bf16.msra.mxu0 0
    %1317 = vmatprep.mubr.bf16.mxu0 0
    %1318 = vmatmul.mubr.bf16.gmra.mxu0 %v1213
    %v1319 = vpop.f32.mrf.mxu0
    %v1320 = vadd.f32 %v1235, %v1319
    %v1321 = vpop.f32.mrf.mxu0
    %v1322 = vpop.f32.mrf.mxu0
    %v1323 = vadd.f32 %v1235, %v1322
    %v1324 = vpop.f32.mrf.mxu0
    %1325 = vdwg.mxu0
    %v1326 = vmax.f32 %v1320, 0.0
    %v1327 = vmax.f32 %v1323, 0.0
    %1328 = vst [vmem:[%s8] sm:$0xff] %v1326
    %1329 = vst [vmem:[%s8 + $0x8] sm:$0xff] %v1327
    // Predicated region
    $region46: #{block_forward.1} parent=1 // pred_check
      _
    $region47: #{block_forward.1} parent=1 // pred_check_branch
      %1331 = sbr.rel (0) target = $region49
    $region48: #{block_forward.1} parent=1 // pred_region
      _
    $region49: #{block_forward.1} parent=1 // pred_fallthru
      _
    // Predicated region
    $region50: #{block_forward.1} parent=1 // pred_check
      _
    $region51: #{block_forward.1} parent=1 // pred_check_branch
      %1333 = sbr.rel (0) target = $region53
    $region52: #{block_forward.1} parent=1 // pred_region
      _
    $region53: #{block_forward.1} parent=1 // pred_fallthru
      _
    %1334 = vsyncpa [#allocation4], 1
    %1335 = vsyncpa [#allocation6], 1

</llo_original>
